<compile_context>
chip_gen: v7x
topology: tpu7x:2x2x1
jax: 0.10.0
libtpu: 0.0.40
codegen_flags: <defaults>
</compile_context>

<pallas_src>
import math
from functools import partial

import jax
import jax.numpy as jnp
from jax.experimental import pallas as pl
from jax.experimental.pallas import tpu as pltpu


def _attention_kernel(x_ref, wqkv_ref, wo_ref, cos_ref, sin_ref, o_ref, *,
                      batch, seq_len, num_heads, num_kv_heads, head_dim, seg):
    """Single invocation: fused QKV+RoPE projection -> causal GQA SDPA -> out proj."""
    B, T = batch, seq_len
    H, KVH, D = num_heads, num_kv_heads, head_dim
    G = H // KVH
    C = H * D
    n_q = H * D                        # 64  (query columns inside a segment)

    x = x_ref[...]                                                     # (B*T, C)

    # One fused projection; segments are 128-lane aligned:
    #   [0      : seg  ) = [Wq | Wk | 0]
    #   [seg    : 2*seg) = [Wq@rot | Wk@rot | 0]
    #   [2*seg  : 3*seg) = [Wv | 0]
    qkv = jnp.dot(x, wqkv_ref[...], preferred_element_type=jnp.float32)  # (B*T, 3*seg)
    base = qkv[:, 0 * seg:1 * seg]      # whole lane tile
    rotp = qkv[:, 1 * seg:2 * seg]      # whole lane tile
    vseg = qkv[:, 2 * seg:3 * seg]      # whole lane tile

    # RoPE folded into the weights -> two elementwise FMAs on full vregs.
    qk = base * cos_ref[...] + rotp * sin_ref[...]                     # (B*T, seg)

    # Causal mask for the G-head row-stacked score matrix (built once).
    row_t = jax.lax.broadcasted_iota(jnp.int32, (T, T), 0)
    col_t = jax.lax.broadcasted_iota(jnp.int32, (T, T), 1)
    causal = jnp.tile(col_t <= row_t, (G, 1))                          # (G*T, T)
    scale = 1.0 / math.sqrt(D)

    # Per-head output-projection blocks, loaded once (static sublane slices).
    wo_h = [wo_ref[h * D:(h + 1) * D, :] for h in range(H)]            # each (D, C)

    for b in range(B):                                                 # static unroll
        r0 = b * T
        qk_b = qk[r0:r0 + T, :]                                        # (T, seg)
        v_b = vseg[r0:r0 + T, :]                                       # (T, seg)
        acc = jnp.zeros((T, C), jnp.float32)
        for j in range(KVH):
            k_j = qk_b[:, n_q + j * D:n_q + (j + 1) * D]               # (T, D)
            v_j = v_b[:, j * D:(j + 1) * D]                            # (T, D)
            # Row-stack the G query heads of this KV group -> shared matmuls.
            q_g = jnp.concatenate(
                [qk_b[:, (j * G + g) * D:(j * G + g + 1) * D] for g in range(G)],
                axis=0)                                                # (G*T, D)
            s = jnp.dot(q_g, k_j.T, preferred_element_type=jnp.float32) * scale
            s = jnp.where(causal, s, -jnp.inf)                         # (G*T, T)
            m = jnp.max(s, axis=-1, keepdims=True)
            p = jnp.exp(s - m)
            p = p * pl.reciprocal(jnp.sum(p, axis=-1, keepdims=True), approx=True)
            pv = jnp.dot(p, v_j, preferred_element_type=jnp.float32)   # (G*T, D)
            # Per-head partial output projection (no lane-axis concat).
            for g in range(G):
                h = j * G + g
                acc = acc + jnp.dot(pv[g * T:(g + 1) * T, :], wo_h[h],
                                    preferred_element_type=jnp.float32)
        o_ref[r0:r0 + T, :] = acc.astype(o_ref.dtype)


def attention_forward(x, wq_pt, wk_pt, wv_pt, wo_pt, freqs_cos, freqs_sin,
                      num_heads, num_kv_heads):
    """Reshapes PyTorch-convention weights, fuses QKV + RoPE, launches the kernel.

    wq_pt: (H*D, C), wk_pt/wv_pt: (KVH*D, C), wo_pt: (C, C)  [torch Linear (out, in)]
    freqs_cos/freqs_sin: (T, D//2)
    """
    B, T, C = x.shape
    H, KVH = num_heads, num_kv_heads
    D = C // H
    f32 = jnp.float32
    n_q, n_k = H * D, KVH * D
    n_qk = n_q + n_k
    seg = ((n_qk + 127) // 128) * 128          # 128-lane-aligned segment width

    wq = wq_pt.T.astype(f32)                   # (C, H*D)   head-major columns
    wk = wk_pt.T.astype(f32)                   # (C, KVH*D)
    wv = wv_pt.T.astype(f32)                   # (C, KVH*D)
    wo = wo_pt.T.astype(f32)                   # (C, C)     out = a @ wo

    # Signed pair-swap matrix: (x @ R)[2i] = -x[2i+1], (x @ R)[2i+1] = x[2i].
    rot = jnp.zeros((D, D), f32)
    idx = jnp.arange(D // 2)
    rot = rot.at[2 * idx + 1, 2 * idx].set(-1.0)
    rot = rot.at[2 * idx, 2 * idx + 1].set(1.0)

    # Fold the rotation into the projection weights (per head block).
    wq_rot = jnp.einsum("chd,de->che", wq.reshape(C, H, D), rot).reshape(C, n_q)
    wk_rot = jnp.einsum("chd,de->che", wk.reshape(C, KVH, D), rot).reshape(C, n_k)

    def pad_lanes(w):                          # zero-pad columns up to `seg`
        return jnp.pad(w, ((0, 0), (0, seg - w.shape[1])))

    # Fused weight with 128-lane-aligned segments.
    w_fused = jnp.concatenate([
        pad_lanes(jnp.concatenate([wq, wk], axis=1)),          # [Wq|Wk|0]
        pad_lanes(jnp.concatenate([wq_rot, wk_rot], axis=1)),  # [Wq@rot|Wk@rot|0]
        pad_lanes(wv),                                         # [Wv|0]
    ], axis=1)                                                 # (C, 3*seg)

    # Interleaved per-element cos/sin, tiled head-major to match [q|k] columns,
    # padded to the 128-lane segment width, and tiled over the batch rows.
    cos_e = jnp.repeat(freqs_cos.astype(f32), 2, axis=-1)      # (T, D)
    sin_e = jnp.repeat(freqs_sin.astype(f32), 2, axis=-1)      # (T, D)
    cos_qk = pad_lanes(jnp.concatenate(
        [jnp.tile(cos_e, (1, H)), jnp.tile(cos_e, (1, KVH))], axis=1))
    sin_qk = pad_lanes(jnp.concatenate(
        [jnp.tile(sin_e, (1, H)), jnp.tile(sin_e, (1, KVH))], axis=1))
    cos_bt = jnp.tile(cos_qk, (B, 1))                          # (B*T, seg)
    sin_bt = jnp.tile(sin_qk, (B, 1))

    x_flat = x.reshape(B * T, C).astype(f32)

    kernel = partial(_attention_kernel, batch=B, seq_len=T,
                     num_heads=H, num_kv_heads=KVH, head_dim=D, seg=seg)

    out = pl.pallas_call(
        kernel,
        out_shape=jax.ShapeDtypeStruct((B * T, C), f32),
        in_specs=[pl.BlockSpec(memory_space=pltpu.MemorySpace.VMEM)] * 5,
        out_specs=pl.BlockSpec(memory_space=pltpu.MemorySpace.VMEM),
    )(x_flat, w_fused, wo, cos_bt, sin_bt)
    return out.reshape(B, T, C)


# ---------------- pure-JAX reference (mirrors the PyTorch forward) -------------
def apply_rotary_emb_ref(x, cos, sin):
    # x: (B, H, T, D); cos/sin: (T, D//2)
    B, H, T, D = x.shape
    xr = x.reshape(B, H, T, D // 2, 2)
    a, b = xr[..., 0], xr[..., 1]
    real = a * cos[None, None] - b * sin[None, None]
    imag = a * sin[None, None] + b * cos[None, None]
    return jnp.stack([real, imag], axis=-1).reshape(B, H, T, D)


def attention_ref(x, wq_pt, wk_pt, wv_pt, wo_pt, cos, sin, H, KVH):
    B, T, C = x.shape
    D = C // H
    G = H // KVH
    q = (x @ wq_pt.T).reshape(B, T, H, D).transpose(0, 2, 1, 3)
    k = (x @ wk_pt.T).reshape(B, T, KVH, D).transpose(0, 2, 1, 3)
    v = (x @ wv_pt.T).reshape(B, T, KVH, D).transpose(0, 2, 1, 3)
    q = apply_rotary_emb_ref(q, cos, sin)
    k = apply_rotary_emb_ref(k, cos, sin)
    k = jnp.repeat(k, G, axis=1)
    v = jnp.repeat(v, G, axis=1)
    s = jnp.einsum("bhqd,bhkd->bhqk", q, k) / math.sqrt(D)
    mask = jnp.tril(jnp.ones((T, T), bool))
    s = jnp.where(mask[None, None], s, -jnp.inf)
    p = jax.nn.softmax(s, axis=-1)
    a = jnp.einsum("bhqk,bhkd->bhqd", p, v)
    a = a.transpose(0, 2, 1, 3).reshape(B, T, C)
    return a @ wo_pt.T


if __name__ == "__main__":
    B, T = 2, 8
    C = 64          # embed_size
    H = 4           # num_heads
    KVH = 2         # num_kv_heads (GQA groups = 2)
    D = C // H      # head_dim = 16

    key = jax.random.PRNGKey(0)
    kx, kq, kk, kv, ko = jax.random.split(key, 5)
    x = jax.random.normal(kx, (B, T, C), jnp.float32)
    # PyTorch nn.Linear weight convention: (out_features, in_features).
    wq_pt = 0.02 * jax.random.normal(kq, (H * D, C), jnp.float32)
    wk_pt = 0.02 * jax.random.normal(kk, (KVH * D, C), jnp.float32)
    wv_pt = 0.02 * jax.random.normal(kv, (KVH * D, C), jnp.float32)
    wo_pt = 0.02 * jax.random.normal(ko, (C, C), jnp.float32)

    # freqs_cis = exp(i * t * theta_j), theta_j = 10000^(-2j/D), shape (T, D//2)
    theta = 1.0 / (10000.0 ** (jnp.arange(0, D, 2, dtype=jnp.float32) / D))
    ang = jnp.arange(T, dtype=jnp.float32)[:, None] * theta[None, :]
    freqs_cos, freqs_sin = jnp.cos(ang), jnp.sin(ang)

    out = attention_forward(x, wq_pt, wk_pt, wv_pt, wo_pt, freqs_cos, freqs_sin,
                            num_heads=H, num_kv_heads=KVH)
    out = jax.block_until_ready(out)

    ref = attention_ref(x, wq_pt, wk_pt, wv_pt, wo_pt, freqs_cos, freqs_sin, H, KVH)
    assert out.shape == (B, T, C)
    assert jnp.allclose(out, ref, atol=1e-4, rtol=1e-4), \
        f"max abs err {jnp.max(jnp.abs(out - ref))}"
    print("KERNEL_OK")
</pallas_src>

<mosaic_0001>
module attributes {stable_mosaic.version = 11 : i64} {
  func.func @_attention_kernel(%arg0: memref<16x64xf32, #tpu.memory_space<vmem>>, %arg1: memref<64x384xf32, #tpu.memory_space<vmem>>, %arg2: memref<64x64xf32, #tpu.memory_space<vmem>>, %arg3: memref<16x128xf32, #tpu.memory_space<vmem>>, %arg4: memref<16x128xf32, #tpu.memory_space<vmem>>, %arg5: memref<16x64xf32, #tpu.memory_space<vmem>>) attributes {dimension_semantics = [], scalar_prefetch = 0 : i64, scratch_operands = 0 : i64, tpu.core_type = #tpu.core_type<tc>} {
    %c0 = arith.constant 0 : index
    %c0_0 = arith.constant 0 : index
    %0 = vector.load %arg0[%c0, %c0_0] : memref<16x64xf32, #tpu.memory_space<vmem>>, vector<16x64xf32>
    %c0_1 = arith.constant 0 : index
    %c0_2 = arith.constant 0 : index
    %1 = vector.load %arg1[%c0_1, %c0_2] : memref<64x384xf32, #tpu.memory_space<vmem>>, vector<64x384xf32>
    %cst = arith.constant dense<0.000000e+00> : vector<16x384xf32>
    %2 = tpu.matmul %0, %1, %cst {dimension_numbers = #tpu.dot_dimension_numbers<[1], [0], [0], [1], [0, 0, 1, 1], [], []>} : vector<16x64xf32>, vector<64x384xf32>, vector<16x384xf32> -> vector<16x384xf32>
    %3 = vector.extract_strided_slice %2 {offsets = [0, 0], sizes = [16, 128], strides = [1, 1]} : vector<16x384xf32> to vector<16x128xf32>
    %4 = vector.extract_strided_slice %2 {offsets = [0, 128], sizes = [16, 128], strides = [1, 1]} : vector<16x384xf32> to vector<16x128xf32>
    %5 = vector.extract_strided_slice %2 {offsets = [0, 256], sizes = [16, 128], strides = [1, 1]} : vector<16x384xf32> to vector<16x128xf32>
    %c0_3 = arith.constant 0 : index
    %c0_4 = arith.constant 0 : index
    %6 = vector.load %arg3[%c0_3, %c0_4] : memref<16x128xf32, #tpu.memory_space<vmem>>, vector<16x128xf32>
    %7 = arith.mulf %3, %6 : vector<16x128xf32>
    %c0_5 = arith.constant 0 : index
    %c0_6 = arith.constant 0 : index
    %8 = vector.load %arg4[%c0_5, %c0_6] : memref<16x128xf32, #tpu.memory_space<vmem>>, vector<16x128xf32>
    %9 = arith.mulf %4, %8 : vector<16x128xf32>
    %10 = arith.addf %7, %9 : vector<16x128xf32>
    %11 = tpu.iota {dimensions = array<i32: 0>} : vector<8x8xi32>
    %12 = tpu.iota {dimensions = array<i32: 1>} : vector<8x8xi32>
    %13 = arith.cmpi sle, %12, %11 : vector<8x8xi32>
    %14 = tpu.concatenate %13, %13 in 0 : vector<8x8xi1>, vector<8x8xi1> -> vector<16x8xi1>
    %c0_7 = arith.constant 0 : index
    %c0_8 = arith.constant 0 : index
    %15 = vector.load %arg2[%c0_7, %c0_8] : memref<64x64xf32, #tpu.memory_space<vmem>>, vector<16x64xf32>
    %c16 = arith.constant 16 : index
    %c0_9 = arith.constant 0 : index
    %16 = vector.load %arg2[%c16, %c0_9] : memref<64x64xf32, #tpu.memory_space<vmem>>, vector<16x64xf32>
    %c32 = arith.constant 32 : index
    %c0_10 = arith.constant 0 : index
    %17 = vector.load %arg2[%c32, %c0_10] : memref<64x64xf32, #tpu.memory_space<vmem>>, vector<16x64xf32>
    %c48 = arith.constant 48 : index
    %c0_11 = arith.constant 0 : index
    %18 = vector.load %arg2[%c48, %c0_11] : memref<64x64xf32, #tpu.memory_space<vmem>>, vector<16x64xf32>
    %19 = vector.extract_strided_slice %10 {offsets = [0, 0], sizes = [8, 128], strides = [1, 1]} : vector<16x128xf32> to vector<8x128xf32>
    %20 = vector.extract_strided_slice %5 {offsets = [0, 0], sizes = [8, 128], strides = [1, 1]} : vector<16x128xf32> to vector<8x128xf32>
    %cst_12 = arith.constant 0.000000e+00 : f32
    %21 = vector.broadcast %cst_12 : f32 to vector<8x64xf32>
    %22 = vector.extract_strided_slice %19 {offsets = [0, 64], sizes = [8, 16], strides = [1, 1]} : vector<8x128xf32> to vector<8x16xf32>
    %23 = vector.extract_strided_slice %20 {offsets = [0, 0], sizes = [8, 16], strides = [1, 1]} : vector<8x128xf32> to vector<8x16xf32>
    %24 = vector.extract_strided_slice %19 {offsets = [0, 0], sizes = [8, 16], strides = [1, 1]} : vector<8x128xf32> to vector<8x16xf32>
    %25 = vector.extract_strided_slice %19 {offsets = [0, 16], sizes = [8, 16], strides = [1, 1]} : vector<8x128xf32> to vector<8x16xf32>
    %26 = tpu.concatenate %24, %25 in 0 : vector<8x16xf32>, vector<8x16xf32> -> vector<16x16xf32>
    %27 = tpu.transpose %22, [1, 0] : vector<8x16xf32> -> vector<16x8xf32>
    %cst_13 = arith.constant dense<0.000000e+00> : vector<16x8xf32>
    %28 = tpu.matmul %26, %27, %cst_13 {dimension_numbers = #tpu.dot_dimension_numbers<[1], [0], [0], [1], [0, 0, 1, 1], [], []>} : vector<16x16xf32>, vector<16x8xf32>, vector<16x8xf32> -> vector<16x8xf32>
    %cst_14 = arith.constant 2.500000e-01 : f32
    %29 = vector.broadcast %cst_14 : f32 to vector<16x8xf32>
    %30 = arith.mulf %28, %29 : vector<16x8xf32>
    %cst_15 = arith.constant 0xFF800000 : f32
    %31 = vector.broadcast %cst_15 : f32 to vector<16x8xf32>
    %32 = arith.select %14, %30, %31 : vector<16x8xi1>, vector<16x8xf32>
    %cst_16 = arith.constant dense<0xFF800000> : vector<16xf32>
    %33 = vector.multi_reduction <maximumf>, %32, %cst_16 [1] : vector<16x8xf32> to vector<16xf32>
    %34 = vector.shape_cast %33 : vector<16xf32> to vector<16x1xf32>
    %35 = vector.broadcast %34 : vector<16x1xf32> to vector<16x8xf32>
    %36 = arith.subf %32, %35 : vector<16x8xf32>
    %37 = math.exp %36 : vector<16x8xf32>
    %cst_17 = arith.constant dense<0.000000e+00> : vector<16xf32>
    %38 = vector.multi_reduction <add>, %37, %cst_17 [1] : vector<16x8xf32> to vector<16xf32>
    %39 = vector.shape_cast %38 : vector<16xf32> to vector<16x1xf32>
    %40 = tpu.reciprocal %39 {approx = true} : vector<16x1xf32> -> vector<16x1xf32>
    %41 = vector.broadcast %40 : vector<16x1xf32> to vector<16x8xf32>
    %42 = arith.mulf %37, %41 : vector<16x8xf32>
    %cst_18 = arith.constant dense<0.000000e+00> : vector<16x16xf32>
    %43 = tpu.matmul %42, %23, %cst_18 {dimension_numbers = #tpu.dot_dimension_numbers<[1], [0], [0], [1], [0, 0, 1, 1], [], []>} : vector<16x8xf32>, vector<8x16xf32>, vector<16x16xf32> -> vector<16x16xf32>
    %44 = vector.extract_strided_slice %43 {offsets = [0, 0], sizes = [8, 16], strides = [1, 1]} : vector<16x16xf32> to vector<8x16xf32>
    %cst_19 = arith.constant dense<0.000000e+00> : vector<8x64xf32>
    %45 = tpu.matmul %44, %15, %cst_19 {dimension_numbers = #tpu.dot_dimension_numbers<[1], [0], [0], [1], [0, 0, 1, 1], [], []>} : vector<8x16xf32>, vector<16x64xf32>, vector<8x64xf32> -> vector<8x64xf32>
    %46 = arith.addf %21, %45 : vector<8x64xf32>
    %47 = vector.extract_strided_slice %43 {offsets = [8, 0], sizes = [8, 16], strides = [1, 1]} : vector<16x16xf32> to vector<8x16xf32>
    %cst_20 = arith.constant dense<0.000000e+00> : vector<8x64xf32>
    %48 = tpu.matmul %47, %16, %cst_20 {dimension_numbers = #tpu.dot_dimension_numbers<[1], [0], [0], [1], [0, 0, 1, 1], [], []>} : vector<8x16xf32>, vector<16x64xf32>, vector<8x64xf32> -> vector<8x64xf32>
    %49 = arith.addf %46, %48 : vector<8x64xf32>
    %50 = vector.extract_strided_slice %19 {offsets = [0, 80], sizes = [8, 16], strides = [1, 1]} : vector<8x128xf32> to vector<8x16xf32>
    %51 = vector.extract_strided_slice %20 {offsets = [0, 16], sizes = [8, 16], strides = [1, 1]} : vector<8x128xf32> to vector<8x16xf32>
    %52 = vector.extract_strided_slice %19 {offsets = [0, 32], sizes = [8, 16], strides = [1, 1]} : vector<8x128xf32> to vector<8x16xf32>
    %53 = vector.extract_strided_slice %19 {offsets = [0, 48], sizes = [8, 16], strides = [1, 1]} : vector<8x128xf32> to vector<8x16xf32>
    %54 = tpu.concatenate %52, %53 in 0 : vector<8x16xf32>, vector<8x16xf32> -> vector<16x16xf32>
    %55 = tpu.transpose %50, [1, 0] : vector<8x16xf32> -> vector<16x8xf32>
    %cst_21 = arith.constant dense<0.000000e+00> : vector<16x8xf32>
    %56 = tpu.matmul %54, %55, %cst_21 {dimension_numbers = #tpu.dot_dimension_numbers<[1], [0], [0], [1], [0, 0, 1, 1], [], []>} : vector<16x16xf32>, vector<16x8xf32>, vector<16x8xf32> -> vector<16x8xf32>
    %cst_22 = arith.constant 2.500000e-01 : f32
    %57 = vector.broadcast %cst_22 : f32 to vector<16x8xf32>
    %58 = arith.mulf %56, %57 : vector<16x8xf32>
    %cst_23 = arith.constant 0xFF800000 : f32
    %59 = vector.broadcast %cst_23 : f32 to vector<16x8xf32>
    %60 = arith.select %14, %58, %59 : vector<16x8xi1>, vector<16x8xf32>
    %cst_24 = arith.constant dense<0xFF800000> : vector<16xf32>
    %61 = vector.multi_reduction <maximumf>, %60, %cst_24 [1] : vector<16x8xf32> to vector<16xf32>
    %62 = vector.shape_cast %61 : vector<16xf32> to vector<16x1xf32>
    %63 = vector.broadcast %62 : vector<16x1xf32> to vector<16x8xf32>
    %64 = arith.subf %60, %63 : vector<16x8xf32>
    %65 = math.exp %64 : vector<16x8xf32>
    %cst_25 = arith.constant dense<0.000000e+00> : vector<16xf32>
    %66 = vector.multi_reduction <add>, %65, %cst_25 [1] : vector<16x8xf32> to vector<16xf32>
    %67 = vector.shape_cast %66 : vector<16xf32> to vector<16x1xf32>
    %68 = tpu.reciprocal %67 {approx = true} : vector<16x1xf32> -> vector<16x1xf32>
    %69 = vector.broadcast %68 : vector<16x1xf32> to vector<16x8xf32>
    %70 = arith.mulf %65, %69 : vector<16x8xf32>
    %cst_26 = arith.constant dense<0.000000e+00> : vector<16x16xf32>
    %71 = tpu.matmul %70, %51, %cst_26 {dimension_numbers = #tpu.dot_dimension_numbers<[1], [0], [0], [1], [0, 0, 1, 1], [], []>} : vector<16x8xf32>, vector<8x16xf32>, vector<16x16xf32> -> vector<16x16xf32>
    %72 = vector.extract_strided_slice %71 {offsets = [0, 0], sizes = [8, 16], strides = [1, 1]} : vector<16x16xf32> to vector<8x16xf32>
    %cst_27 = arith.constant dense<0.000000e+00> : vector<8x64xf32>
    %73 = tpu.matmul %72, %17, %cst_27 {dimension_numbers = #tpu.dot_dimension_numbers<[1], [0], [0], [1], [0, 0, 1, 1], [], []>} : vector<8x16xf32>, vector<16x64xf32>, vector<8x64xf32> -> vector<8x64xf32>
    %74 = arith.addf %49, %73 : vector<8x64xf32>
    %75 = vector.extract_strided_slice %71 {offsets = [8, 0], sizes = [8, 16], strides = [1, 1]} : vector<16x16xf32> to vector<8x16xf32>
    %cst_28 = arith.constant dense<0.000000e+00> : vector<8x64xf32>
    %76 = tpu.matmul %75, %18, %cst_28 {dimension_numbers = #tpu.dot_dimension_numbers<[1], [0], [0], [1], [0, 0, 1, 1], [], []>} : vector<8x16xf32>, vector<16x64xf32>, vector<8x64xf32> -> vector<8x64xf32>
    %77 = arith.addf %74, %76 : vector<8x64xf32>
    %c0_29 = arith.constant 0 : index
    %c0_30 = arith.constant 0 : index
    %78 = vector.load %arg5[%c0_29, %c0_30] : memref<16x64xf32, #tpu.memory_space<vmem>>, vector<8x64xf32>
    tpu.vector_store %arg5[%c0_29, %c0_30], %77 {strides = array<i32>} : memref<16x64xf32, #tpu.memory_space<vmem>>, vector<8x64xf32>,
    %79 = vector.extract_strided_slice %10 {offsets = [8, 0], sizes = [8, 128], strides = [1, 1]} : vector<16x128xf32> to vector<8x128xf32>
    %80 = vector.extract_strided_slice %5 {offsets = [8, 0], sizes = [8, 128], strides = [1, 1]} : vector<16x128xf32> to vector<8x128xf32>
    %cst_31 = arith.constant 0.000000e+00 : f32
    %81 = vector.broadcast %cst_31 : f32 to vector<8x64xf32>
    %82 = vector.extract_strided_slice %79 {offsets = [0, 64], sizes = [8, 16], strides = [1, 1]} : vector<8x128xf32> to vector<8x16xf32>
    %83 = vector.extract_strided_slice %80 {offsets = [0, 0], sizes = [8, 16], strides = [1, 1]} : vector<8x128xf32> to vector<8x16xf32>
    %84 = vector.extract_strided_slice %79 {offsets = [0, 0], sizes = [8, 16], strides = [1, 1]} : vector<8x128xf32> to vector<8x16xf32>
    %85 = vector.extract_strided_slice %79 {offsets = [0, 16], sizes = [8, 16], strides = [1, 1]} : vector<8x128xf32> to vector<8x16xf32>
    %86 = tpu.concatenate %84, %85 in 0 : vector<8x16xf32>, vector<8x16xf32> -> vector<16x16xf32>
    %87 = tpu.transpose %82, [1, 0] : vector<8x16xf32> -> vector<16x8xf32>
    %cst_32 = arith.constant dense<0.000000e+00> : vector<16x8xf32>
    %88 = tpu.matmul %86, %87, %cst_32 {dimension_numbers = #tpu.dot_dimension_numbers<[1], [0], [0], [1], [0, 0, 1, 1], [], []>} : vector<16x16xf32>, vector<16x8xf32>, vector<16x8xf32> -> vector<16x8xf32>
    %cst_33 = arith.constant 2.500000e-01 : f32
    %89 = vector.broadcast %cst_33 : f32 to vector<16x8xf32>
    %90 = arith.mulf %88, %89 : vector<16x8xf32>
    %cst_34 = arith.constant 0xFF800000 : f32
    %91 = vector.broadcast %cst_34 : f32 to vector<16x8xf32>
    %92 = arith.select %14, %90, %91 : vector<16x8xi1>, vector<16x8xf32>
    %cst_35 = arith.constant dense<0xFF800000> : vector<16xf32>
    %93 = vector.multi_reduction <maximumf>, %92, %cst_35 [1] : vector<16x8xf32> to vector<16xf32>
    %94 = vector.shape_cast %93 : vector<16xf32> to vector<16x1xf32>
    %95 = vector.broadcast %94 : vector<16x1xf32> to vector<16x8xf32>
    %96 = arith.subf %92, %95 : vector<16x8xf32>
    %97 = math.exp %96 : vector<16x8xf32>
    %cst_36 = arith.constant dense<0.000000e+00> : vector<16xf32>
    %98 = vector.multi_reduction <add>, %97, %cst_36 [1] : vector<16x8xf32> to vector<16xf32>
    %99 = vector.shape_cast %98 : vector<16xf32> to vector<16x1xf32>
    %100 = tpu.reciprocal %99 {approx = true} : vector<16x1xf32> -> vector<16x1xf32>
    %101 = vector.broadcast %100 : vector<16x1xf32> to vector<16x8xf32>
    %102 = arith.mulf %97, %101 : vector<16x8xf32>
    %cst_37 = arith.constant dense<0.000000e+00> : vector<16x16xf32>
    %103 = tpu.matmul %102, %83, %cst_37 {dimension_numbers = #tpu.dot_dimension_numbers<[1], [0], [0], [1], [0, 0, 1, 1], [], []>} : vector<16x8xf32>, vector<8x16xf32>, vector<16x16xf32> -> vector<16x16xf32>
    %104 = vector.extract_strided_slice %103 {offsets = [0, 0], sizes = [8, 16], strides = [1, 1]} : vector<16x16xf32> to vector<8x16xf32>
    %cst_38 = arith.constant dense<0.000000e+00> : vector<8x64xf32>
    %105 = tpu.matmul %104, %15, %cst_38 {dimension_numbers = #tpu.dot_dimension_numbers<[1], [0], [0], [1], [0, 0, 1, 1], [], []>} : vector<8x16xf32>, vector<16x64xf32>, vector<8x64xf32> -> vector<8x64xf32>
    %106 = arith.addf %81, %105 : vector<8x64xf32>
    %107 = vector.extract_strided_slice %103 {offsets = [8, 0], sizes = [8, 16], strides = [1, 1]} : vector<16x16xf32> to vector<8x16xf32>
    %cst_39 = arith.constant dense<0.000000e+00> : vector<8x64xf32>
    %108 = tpu.matmul %107, %16, %cst_39 {dimension_numbers = #tpu.dot_dimension_numbers<[1], [0], [0], [1], [0, 0, 1, 1], [], []>} : vector<8x16xf32>, vector<16x64xf32>, vector<8x64xf32> -> vector<8x64xf32>
    %109 = arith.addf %106, %108 : vector<8x64xf32>
    %110 = vector.extract_strided_slice %79 {offsets = [0, 80], sizes = [8, 16], strides = [1, 1]} : vector<8x128xf32> to vector<8x16xf32>
    %111 = vector.extract_strided_slice %80 {offsets = [0, 16], sizes = [8, 16], strides = [1, 1]} : vector<8x128xf32> to vector<8x16xf32>
    %112 = vector.extract_strided_slice %79 {offsets = [0, 32], sizes = [8, 16], strides = [1, 1]} : vector<8x128xf32> to vector<8x16xf32>
    %113 = vector.extract_strided_slice %79 {offsets = [0, 48], sizes = [8, 16], strides = [1, 1]} : vector<8x128xf32> to vector<8x16xf32>
    %114 = tpu.concatenate %112, %113 in 0 : vector<8x16xf32>, vector<8x16xf32> -> vector<16x16xf32>
    %115 = tpu.transpose %110, [1, 0] : vector<8x16xf32> -> vector<16x8xf32>
    %cst_40 = arith.constant dense<0.000000e+00> : vector<16x8xf32>
    %116 = tpu.matmul %114, %115, %cst_40 {dimension_numbers = #tpu.dot_dimension_numbers<[1], [0], [0], [1], [0, 0, 1, 1], [], []>} : vector<16x16xf32>, vector<16x8xf32>, vector<16x8xf32> -> vector<16x8xf32>
    %cst_41 = arith.constant 2.500000e-01 : f32
    %117 = vector.broadcast %cst_41 : f32 to vector<16x8xf32>
    %118 = arith.mulf %116, %117 : vector<16x8xf32>
    %cst_42 = arith.constant 0xFF800000 : f32
    %119 = vector.broadcast %cst_42 : f32 to vector<16x8xf32>
    %120 = arith.select %14, %118, %119 : vector<16x8xi1>, vector<16x8xf32>
    %cst_43 = arith.constant dense<0xFF800000> : vector<16xf32>
    %121 = vector.multi_reduction <maximumf>, %120, %cst_43 [1] : vector<16x8xf32> to vector<16xf32>
    %122 = vector.shape_cast %121 : vector<16xf32> to vector<16x1xf32>
    %123 = vector.broadcast %122 : vector<16x1xf32> to vector<16x8xf32>
    %124 = arith.subf %120, %123 : vector<16x8xf32>
    %125 = math.exp %124 : vector<16x8xf32>
    %cst_44 = arith.constant dense<0.000000e+00> : vector<16xf32>
    %126 = vector.multi_reduction <add>, %125, %cst_44 [1] : vector<16x8xf32> to vector<16xf32>
    %127 = vector.shape_cast %126 : vector<16xf32> to vector<16x1xf32>
    %128 = tpu.reciprocal %127 {approx = true} : vector<16x1xf32> -> vector<16x1xf32>
    %129 = vector.broadcast %128 : vector<16x1xf32> to vector<16x8xf32>
    %130 = arith.mulf %125, %129 : vector<16x8xf32>
    %cst_45 = arith.constant dense<0.000000e+00> : vector<16x16xf32>
    %131 = tpu.matmul %130, %111, %cst_45 {dimension_numbers = #tpu.dot_dimension_numbers<[1], [0], [0], [1], [0, 0, 1, 1], [], []>} : vector<16x8xf32>, vector<8x16xf32>, vector<16x16xf32> -> vector<16x16xf32>
    %132 = vector.extract_strided_slice %131 {offsets = [0, 0], sizes = [8, 16], strides = [1, 1]} : vector<16x16xf32> to vector<8x16xf32>
    %cst_46 = arith.constant dense<0.000000e+00> : vector<8x64xf32>
    %133 = tpu.matmul %132, %17, %cst_46 {dimension_numbers = #tpu.dot_dimension_numbers<[1], [0], [0], [1], [0, 0, 1, 1], [], []>} : vector<8x16xf32>, vector<16x64xf32>, vector<8x64xf32> -> vector<8x64xf32>
    %134 = arith.addf %109, %133 : vector<8x64xf32>
    %135 = vector.extract_strided_slice %131 {offsets = [8, 0], sizes = [8, 16], strides = [1, 1]} : vector<16x16xf32> to vector<8x16xf32>
    %cst_47 = arith.constant dense<0.000000e+00> : vector<8x64xf32>
    %136 = tpu.matmul %135, %18, %cst_47 {dimension_numbers = #tpu.dot_dimension_numbers<[1], [0], [0], [1], [0, 0, 1, 1], [], []>} : vector<8x16xf32>, vector<16x64xf32>, vector<8x64xf32> -> vector<8x64xf32>
    %137 = arith.addf %134, %136 : vector<8x64xf32>
    %c8 = arith.constant 8 : index
    %c0_48 = arith.constant 0 : index
    %138 = vector.load %arg5[%c8, %c0_48] : memref<16x64xf32, #tpu.memory_space<vmem>>, vector<8x64xf32>
    tpu.vector_store %arg5[%c8, %c0_48], %137 {strides = array<i32>} : memref<16x64xf32, #tpu.memory_space<vmem>>, vector<8x64xf32>,
    return
  }
}

</mosaic_0001>

<llo_original>
// kernel: tpu_custom_call.1
$region0: #{tpu_custom_call.1}
  #allocation0 [shape = 'u32[]', space=smem, size = 0x4, offset = 0x4, fixed_abs, tag = 'smem constant byte address 0x4 - core index']
  #allocation1 [shape = 'u32[144,128]{1,0:T(1,128)}', space=vmem, size = 0x12000, scoped, tag = 'internal scratch']
  %s0 = inlined_call_operand.hbm [shape: f32[16,64], index: 0, kind: input, shape index: {}]
  %s1 = inlined_call_operand.hbm [shape: f32[64,384], index: 1, kind: input, shape index: {}]
  %s2 = inlined_call_operand.hbm [shape: f32[64,64], index: 2, kind: input, shape index: {}]
  %s3 = inlined_call_operand.hbm [shape: f32[16,128], index: 3, kind: input, shape index: {}]
  %s4 = inlined_call_operand.hbm [shape: f32[16,128], index: 4, kind: input, shape index: {}]
  %s5 = inlined_call_operand.hbm [shape: f32[16,64], index: 5, kind: output, shape index: {}]
  %s6 = sld [smem:[#allocation0]]
  $region50: #{tpu_custom_call.1} parent=0
    _
  %s8 = ssub.s32 1, %s6
  %s9 = scalar_select 0, %s8, %s6
  $region1: #{tpu_custom_call.1} parent=0
    #allocation2 [shape = 'u8[8192]{0}', space=vmem, size = 0x2000, scoped, tag = 'input window, operand 0, single buffered']
    #allocation3 [shape = 's32[1]{0}', space=sflag, size = 0x4, scoped, tag = 'scoped memory for tpu_custom_call.1']
    #allocation4 [shape = 's32[1]{0}', space=sflag, size = 0x4, scoped, tag = 'scoped memory for tpu_custom_call.1']
    #allocation5 [shape = 'u8[98304]{0}', space=vmem, size = 0x18000, scoped, tag = 'input window, operand 1, single buffered']
    #allocation6 [shape = 's32[1]{0}', space=sflag, size = 0x4, scoped, tag = 'scoped memory for tpu_custom_call.1']
    #allocation7 [shape = 'u8[32768]{0}', space=vmem, size = 0x8000, scoped, tag = 'input window, operand 2, single buffered']
    #allocation8 [shape = 'u8[8192]{0}', space=vmem, size = 0x2000, scoped, tag = 'input window, operand 3, single buffered']
    #allocation9 [shape = 's32[1]{0}', space=sflag, size = 0x4, scoped, tag = 'scoped memory for tpu_custom_call.1']
    #allocation10 [shape = 'u8[8192]{0}', space=vmem, size = 0x2000, scoped, tag = 'input window, operand 4, single buffered']
    #allocation11 [shape = 'u8[8192]{0}', space=vmem, size = 0x2000, scoped, tag = 'output window, operand 0, single buffered']
    %10 = vsyncpa [#allocation3], 0
    %11 = vsyncpa [#allocation6], 0
    %12 = vsyncpa [#allocation9], 0
    %13 = vsyncpa [#allocation4], 0
    // Predicated region
    $region2: #{tpu_custom_call.1} parent=1 // pred_check
      _
    $region3: #{tpu_custom_call.1} parent=1 // pred_check_branch
      %15 = sbr.rel (0) target = $region5
    $region4: #{tpu_custom_call.1} parent=1 // pred_region
      %s17 = ssub.s32 256, 256
      %18 = vsyncadd [#allocation3], %s17
      %s19 = sshll.u32 [#allocation2], 4
      %s20 = int_to_ptr.vmem [resolvable:$true] %s19
      %25 = dma.hbm_to_vmem [thread:$0]  %s0, 256, %s20, [#allocation3], 128, 128, 8
    $region5: #{tpu_custom_call.1} parent=1 // pred_fallthru
      _
    // Predicated region
    $region6: #{tpu_custom_call.1} parent=1 // pred_check
      _
    $region7: #{tpu_custom_call.1} parent=1 // pred_check_branch
      %27 = sbr.rel (0) target = $region9
    $region8: #{tpu_custom_call.1} parent=1 // pred_region
      %s29 = ssub.s32 3072, 3072
      %30 = vsyncadd [#allocation6], %s29
      %s31 = sshll.u32 [#allocation5], 4
      %s32 = int_to_ptr.vmem [resolvable:$true] %s31
      %37 = dma.hbm_to_vmem [thread:$0]  %s1, 3072, %s32, [#allocation6], 384, 384, 24
    $region9: #{tpu_custom_call.1} parent=1 // pred_fallthru
      _
    // Predicated region
    $region10: #{tpu_custom_call.1} parent=1 // pred_check
      _
    $region11: #{tpu_custom_call.1} parent=1 // pred_check_branch
      %39 = sbr.rel (0) target = $region13
    $region12: #{tpu_custom_call.1} parent=1 // pred_region
      %s41 = ssub.s32 1024, 1024
      %42 = vsyncadd [#allocation6], %s41
      %s43 = sshll.u32 [#allocation7], 4
      %s44 = int_to_ptr.vmem [resolvable:$true] %s43
      %49 = dma.hbm_to_vmem [thread:$0]  %s2, 1024, %s44, [#allocation6], 128, 128, 8
    $region13: #{tpu_custom_call.1} parent=1 // pred_fallthru
      _
    // Predicated region
    $region14: #{tpu_custom_call.1} parent=1 // pred_check
      _
    $region15: #{tpu_custom_call.1} parent=1 // pred_check_branch
      %51 = sbr.rel (0) target = $region17
    $region16: #{tpu_custom_call.1} parent=1 // pred_region
      %s53 = ssub.s32 256, 256
      %54 = vsyncadd [#allocation9], %s53
      %s55 = sshll.u32 [#allocation8], 4
      %s56 = int_to_ptr.vmem [resolvable:$true] %s55
      %61 = dma.hbm_to_vmem [thread:$0]  %s3, 256, %s56, [#allocation9], 128, 128, 8
    $region17: #{tpu_custom_call.1} parent=1 // pred_fallthru
      _
    // Predicated region
    $region18: #{tpu_custom_call.1} parent=1 // pred_check
      _
    $region19: #{tpu_custom_call.1} parent=1 // pred_check_branch
      %63 = sbr.rel (0) target = $region21
    $region20: #{tpu_custom_call.1} parent=1 // pred_region
      %s65 = ssub.s32 256, 256
      %66 = vsyncadd [#allocation9], %s65
      %s67 = sshll.u32 [#allocation10], 4
      %s68 = int_to_ptr.vmem [resolvable:$true] %s67
      %73 = dma.hbm_to_vmem [thread:$0]  %s4, 256, %s68, [#allocation9], 128, 128, 8
    $region21: #{tpu_custom_call.1} parent=1 // pred_fallthru
      _
    // Predicated region
    $region22: #{tpu_custom_call.1} parent=1 // pred_check
      _
    $region23: #{tpu_custom_call.1} parent=1 // pred_check_branch
      %75 = sbr.rel (0) target = $region25
    $region24: #{tpu_custom_call.1} parent=1 // pred_region
      %76 = dma.done [#allocation3], 256
    $region25: #{tpu_custom_call.1} parent=1 // pred_fallthru
      _
    // Predicated region
    $region26: #{tpu_custom_call.1} parent=1 // pred_check
      _
    $region27: #{tpu_custom_call.1} parent=1 // pred_check_branch
      %78 = sbr.rel (0) target = $region29
    $region28: #{tpu_custom_call.1} parent=1 // pred_region
      %79 = dma.done [#allocation6], 3072
    $region29: #{tpu_custom_call.1} parent=1 // pred_fallthru
      _
    // Predicated region
    $region30: #{tpu_custom_call.1} parent=1 // pred_check
      _
    $region31: #{tpu_custom_call.1} parent=1 // pred_check_branch
      %81 = sbr.rel (0) target = $region33
    $region32: #{tpu_custom_call.1} parent=1 // pred_region
      %82 = dma.done [#allocation6], 1024
    $region33: #{tpu_custom_call.1} parent=1 // pred_fallthru
      _
    // Predicated region
    $region34: #{tpu_custom_call.1} parent=1 // pred_check
      _
    $region35: #{tpu_custom_call.1} parent=1 // pred_check_branch
      %84 = sbr.rel (0) target = $region37
    $region36: #{tpu_custom_call.1} parent=1 // pred_region
      %85 = dma.done [#allocation9], 256
    $region37: #{tpu_custom_call.1} parent=1 // pred_fallthru
      _
    // Predicated region
    $region38: #{tpu_custom_call.1} parent=1 // pred_check
      _
    $region39: #{tpu_custom_call.1} parent=1 // pred_check_branch
      %87 = sbr.rel (0) target = $region41
    $region40: #{tpu_custom_call.1} parent=1 // pred_region
      %88 = dma.done [#allocation9], 256
    $region41: #{tpu_custom_call.1} parent=1 // pred_fallthru
      _
    %v89 = vld [vmem:[#allocation2] sm:$0xff]
    %v90 = vld [vmem:[#allocation2 + $0x8] sm:$0xff]
    %v91 = vld [vmem:[#allocation5] sm:$0xff]
    %v92 = vld [vmem:[#allocation5 + $0x8] sm:$0xff]
    %v93 = vld [vmem:[#allocation5 + $0x10] sm:$0xff]
    %v94 = vld [vmem:[#allocation5 + $0x18] sm:$0xff]
    %v95 = vld [vmem:[#allocation5 + $0x20] sm:$0xff]
    %v96 = vld [vmem:[#allocation5 + $0x28] sm:$0xff]
    %v97 = vld [vmem:[#allocation5 + $0x30] sm:$0xff]
    %v98 = vld [vmem:[#allocation5 + $0x38] sm:$0xff]
    %v99 = vld [vmem:[#allocation5 + $0x40] sm:$0xff]
    %v100 = vld [vmem:[#allocation5 + $0x48] sm:$0xff]
    %v101 = vld [vmem:[#allocation5 + $0x50] sm:$0xff]
    %v102 = vld [vmem:[#allocation5 + $0x58] sm:$0xff]
    %v103 = vld [vmem:[#allocation5 + $0x60] sm:$0xff]
    %v104 = vld [vmem:[#allocation5 + $0x68] sm:$0xff]
    %v105 = vld [vmem:[#allocation5 + $0x70] sm:$0xff]
    %v106 = vld [vmem:[#allocation5 + $0x78] sm:$0xff]
    %v107 = vld [vmem:[#allocation5 + $0x80] sm:$0xff]
    %v108 = vld [vmem:[#allocation5 + $0x88] sm:$0xff]
    %v109 = vld [vmem:[#allocation5 + $0x90] sm:$0xff]
    %v110 = vld [vmem:[#allocation5 + $0x98] sm:$0xff]
    %v111 = vld [vmem:[#allocation5 + $0xa0] sm:$0xff]
    %v112 = vld [vmem:[#allocation5 + $0xa8] sm:$0xff]
    %v113 = vld [vmem:[#allocation5 + $0xb0] sm:$0xff]
    %v114 = vld [vmem:[#allocation5 + $0xb8] sm:$0xff]
    %vm115 = vcmask 523264
    %v117 = vsel %vm115, %v89, 0
    %v120 = vsel %vm115, %v90, 0
    %122 = vmatprep.subr.mxu0 %v92
    %123 = vmatpush1.msra.mxu0 %v91
    %124 = vmatprep.subr.mxu0 %v95
    %125 = vmatpush1.msra.mxu0 %v94
    %126 = vmatprep.subr.mxu0 %v98
    %127 = vmatpush1.msra.mxu0 %v97
    %128 = vmatprep.subr.mxu0 %v101
    %129 = vmatpush1.msra.mxu0 %v100
    %130 = vmatprep.subr.mxu0 %v104
    %131 = vmatpush1.msra.mxu0 %v103
    %132 = vmatprep.subr.mxu0 %v107
    %133 = vmatpush1.msra.mxu0 %v106
    %134 = vmatprep.subr.mxu0 %v110
    %135 = vmatpush1.msra.mxu0 %v109
    %136 = vmatprep.subr.mxu0 %v113
    %137 = vmatpush1.msra.mxu0 %v112
    %138 = vmatprep.subr.mxu0 0.0
    %139 = vmatpush1.msra.mxu0 0.0
    %140 = vmatprep.subr.mxu0 0.0
    %141 = vmatpush1.msra.mxu0 0.0
    %142 = vmatprep.subr.mxu0 0.0
    %143 = vmatpush1.msra.mxu0 0.0
    %144 = vmatprep.subr.mxu0 0.0
    %145 = vmatpush1.msra.mxu0 0.0
    %146 = vmatprep.subr.mxu0 0.0
    %147 = vmatpush1.msra.mxu0 0.0
    %148 = vmatprep.subr.mxu0 0.0
    %149 = vmatpush1.msra.mxu0 0.0
    %150 = vmatprep.subr.mxu0 0.0
    %151 = vmatpush1.msra.mxu0 0.0
    %152 = vmatprep.subr.mxu0 0.0
    %153 = vmatpush1.msra.mxu0 0.0
    %154 = vmatprep.subr.mxu0 0.0
    %155 = vmatpush1.msra.mxu0 0.0
    %156 = vmatprep.subr.mxu0 0.0
    %157 = vmatpush1.msra.mxu0 0.0
    %158 = vmatprep.subr.mxu0 0.0
    %159 = vmatpush1.msra.mxu0 0.0
    %160 = vmatprep.subr.mxu0 0.0
    %161 = vmatpush1.msra.mxu0 0.0
    %162 = vmatprep.subr.mxu0 0.0
    %163 = vmatpush1.msra.mxu0 0.0
    %164 = vmatprep.subr.mxu0 0.0
    %165 = vmatpush1.msra.mxu0 0.0
    %166 = vmatprep.subr.mxu0 0.0
    %167 = vmatpush1.msra.mxu0 0.0
    %168 = vmatprep.subr.mxu0 0.0
    %169 = vmatpush1.msra.mxu0 0.0
    %170 = vmatprep.subr.mxu0 0.0
    %171 = vmatpush1.msra.mxu0 0.0
    %172 = vmatprep.subr.mxu0 0.0
    %173 = vmatpush1.msra.mxu0 0.0
    %174 = vmatprep.subr.mxu0 0.0
    %175 = vmatpush1.msra.mxu0 0.0
    %176 = vmatprep.subr.mxu0 0.0
    %177 = vmatpush1.msra.mxu0 0.0
    %178 = vmatprep.subr.mxu0 0.0
    %179 = vmatpush1.msra.mxu0 0.0
    %180 = vmatprep.subr.mxu0 0.0
    %181 = vmatpush1.msra.mxu0 0.0
    %182 = vmatprep.subr.mxu0 0.0
    %183 = vmatpush1.msra.mxu0 0.0
    %184 = vmatprep.subr.mxu0 0.0
    %185 = vmatpush1.msra.mxu0 0.0
    %186 = vmatprep.mubr.f32.mxu0 0.0
    %187 = vmatmul.mubr.f32.gmra.mrb[0].mxu0 %v117
    %v188 = vpop.f32.mrb[0].mxu0
    %v189 = vadd.f32 0.0, %v188
    %v190 = vpop.f32.mrb[0].mxu0
    %v191 = vadd.f32 0.0, %v190
    %192 = vmatprep.mubr.f32.mxu0 0.0
    %193 = vmatmul.mubr.f32.gmra.mrb[0].mxu0 %v120
    %v194 = vpop.f32.mrb[0].mxu0
    %v195 = vadd.f32 0.0, %v194
    %v196 = vpop.f32.mrb[0].mxu0
    %v197 = vadd.f32 0.0, %v196
    %198 = vdwg.mxu0
    %199 = vmatprep.subr.mxu0 0.0
    %200 = vmatpush1.msra.mxu0 %v93
    %201 = vmatprep.subr.mxu0 0.0
    %202 = vmatpush1.msra.mxu0 %v96
    %203 = vmatprep.subr.mxu0 0.0
    %204 = vmatpush1.msra.mxu0 %v99
    %205 = vmatprep.subr.mxu0 0.0
    %206 = vmatpush1.msra.mxu0 %v102
    %207 = vmatprep.subr.mxu0 0.0
    %208 = vmatpush1.msra.mxu0 %v105
    %209 = vmatprep.subr.mxu0 0.0
    %210 = vmatpush1.msra.mxu0 %v108
    %211 = vmatprep.subr.mxu0 0.0
    %212 = vmatpush1.msra.mxu0 %v111
    %213 = vmatprep.subr.mxu0 0.0
    %214 = vmatpush1.msra.mxu0 %v114
    %215 = vmatprep.subr.mxu0 0.0
    %216 = vmatpush1.msra.mxu0 0.0
    %217 = vmatprep.subr.mxu0 0.0
    %218 = vmatpush1.msra.mxu0 0.0
    %219 = vmatprep.subr.mxu0 0.0
    %220 = vmatpush1.msra.mxu0 0.0
    %221 = vmatprep.subr.mxu0 0.0
    %222 = vmatpush1.msra.mxu0 0.0
    %223 = vmatprep.subr.mxu0 0.0
    %224 = vmatpush1.msra.mxu0 0.0
    %225 = vmatprep.subr.mxu0 0.0
    %226 = vmatpush1.msra.mxu0 0.0
    %227 = vmatprep.subr.mxu0 0.0
    %228 = vmatpush1.msra.mxu0 0.0
    %229 = vmatprep.subr.mxu0 0.0
    %230 = vmatpush1.msra.mxu0 0.0
    %231 = vmatprep.subr.mxu0 0.0
    %232 = vmatpush1.msra.mxu0 0.0
    %233 = vmatprep.subr.mxu0 0.0
    %234 = vmatpush1.msra.mxu0 0.0
    %235 = vmatprep.subr.mxu0 0.0
    %236 = vmatpush1.msra.mxu0 0.0
    %237 = vmatprep.subr.mxu0 0.0
    %238 = vmatpush1.msra.mxu0 0.0
    %239 = vmatprep.subr.mxu0 0.0
    %240 = vmatpush1.msra.mxu0 0.0
    %241 = vmatprep.subr.mxu0 0.0
    %242 = vmatpush1.msra.mxu0 0.0
    %243 = vmatprep.subr.mxu0 0.0
    %244 = vmatpush1.msra.mxu0 0.0
    %245 = vmatprep.subr.mxu0 0.0
    %246 = vmatpush1.msra.mxu0 0.0
    %247 = vmatprep.subr.mxu0 0.0
    %248 = vmatpush1.msra.mxu0 0.0
    %249 = vmatprep.subr.mxu0 0.0
    %250 = vmatpush1.msra.mxu0 0.0
    %251 = vmatprep.subr.mxu0 0.0
    %252 = vmatpush1.msra.mxu0 0.0
    %253 = vmatprep.subr.mxu0 0.0
    %254 = vmatpush1.msra.mxu0 0.0
    %255 = vmatprep.subr.mxu0 0.0
    %256 = vmatpush1.msra.mxu0 0.0
    %257 = vmatprep.subr.mxu0 0.0
    %258 = vmatpush1.msra.mxu0 0.0
    %259 = vmatprep.subr.mxu0 0.0
    %260 = vmatpush1.msra.mxu0 0.0
    %261 = vmatprep.subr.mxu0 0.0
    %262 = vmatpush1.msra.mxu0 0.0
    %263 = vmatprep.mubr.f32.mxu0 0.0
    %264 = vmatmul.mubr.f32.gmra.mrb[0].mxu0 %v117
    %v265 = vpop.f32.mrb[0].mxu0
    %v266 = vadd.f32 0.0, %v265
    %v267 = vpop.f32.mrb[0].mxu0
    %268 = vmatprep.mubr.f32.mxu0 0.0
    %269 = vmatmul.mubr.f32.gmra.mrb[0].mxu0 %v120
    %v270 = vpop.f32.mrb[0].mxu0
    %v271 = vadd.f32 0.0, %v270
    %v272 = vpop.f32.mrb[0].mxu0
    %273 = vdwg.mxu0
    %v274 = vld [vmem:[#allocation8] sm:$0xff]
    %v275 = vld [vmem:[#allocation8 + $0x8] sm:$0xff]
    %v276 = vmul.f32 %v189, %v274
    %v277 = vmul.f32 %v195, %v275
    %v278 = vld [vmem:[#allocation10] sm:$0xff]
    %v279 = vld [vmem:[#allocation10 + $0x8] sm:$0xff]
    %v280 = vmul.f32 %v191, %v278
    %v281 = vmul.f32 %v197, %v279
    %v282 = vadd.f32 %v276, %v280
    %v283 = vadd.f32 %v277, %v281
    %v284 = vlaneseq
    %v285 = vshrl.u32 %v284, 7
    %v286 = vlaneseq
    %v287 = vand.u32 %v286, 127
    %vm288 = vcmp.le.s32.totalorder %v287, %v285
    %v289 = vld [vmem:[#allocation7] sm:$0xff]
    %v290 = vld [vmem:[#allocation7 + $0x8] sm:$0xff]
    %v291 = vld [vmem:[#allocation7 + $0x10] sm:$0xff]
    %v292 = vld [vmem:[#allocation7 + $0x18] sm:$0xff]
    %v293 = vld [vmem:[#allocation7 + $0x20] sm:$0xff]
    %v294 = vld [vmem:[#allocation7 + $0x28] sm:$0xff]
    %v295 = vld [vmem:[#allocation7 + $0x30] sm:$0xff]
    %v296 = vld [vmem:[#allocation7 + $0x38] sm:$0xff]
    %298 = vrot.lane.b32.xlu0 %v282, 112
    %v299 = vpop.permute.xlu0 %298
    %300 = vrot.lane.b32.xlu0 %v282, 64
    %v301 = vpop.permute.xlu0 %300
    %vm302 = vcmask 130048
    %v303 = vsel %vm302, %v282, 0
    %v305 = vsel %vm302, %v299, 0
    %v307 = vsel %vm302, %v301, 0
    %309 = vmatprep.subr.mxu0 0.0
    %310 = vmatpush1.xpose.msra.mxu0 %v307
    %311 = vmatprep.subr.mxu0 0.0
    %312 = vmatpush1.xpose.msra.mxu0 0.0
    %313 = vmatprep.subr.mxu0 0.0
    %314 = vmatpush1.xpose.msra.mxu0 0.0
    %315 = vmatprep.subr.mxu0 0.0
    %316 = vmatpush1.xpose.msra.mxu0 0.0
    %317 = vmatprep.subr.mxu0 0.0
    %318 = vmatpush1.xpose.msra.mxu0 0.0
    %319 = vmatprep.subr.mxu0 0.0
    %320 = vmatpush1.xpose.msra.mxu0 0.0
    %321 = vmatprep.subr.mxu0 0.0
    %322 = vmatpush1.xpose.msra.mxu0 0.0
    %323 = vmatprep.subr.mxu0 0.0
    %324 = vmatpush1.xpose.msra.mxu0 0.0
    %325 = vmatprep.subr.mxu0 0.0
    %326 = vmatpush1.xpose.msra.mxu0 0.0
    %327 = vmatprep.subr.mxu0 0.0
    %328 = vmatpush1.xpose.msra.mxu0 0.0
    %329 = vmatprep.subr.mxu0 0.0
    %330 = vmatpush1.xpose.msra.mxu0 0.0
    %331 = vmatprep.subr.mxu0 0.0
    %332 = vmatpush1.xpose.msra.mxu0 0.0
    %333 = vmatprep.subr.mxu0 0.0
    %334 = vmatpush1.xpose.msra.mxu0 0.0
    %335 = vmatprep.subr.mxu0 0.0
    %336 = vmatpush1.xpose.msra.mxu0 0.0
    %337 = vmatprep.subr.mxu0 0.0
    %338 = vmatpush1.xpose.msra.mxu0 0.0
    %339 = vmatprep.subr.mxu0 0.0
    %340 = vmatpush1.xpose.msra.mxu0 0.0
    %341 = vmatprep.subr.mxu0 0.0
    %342 = vmatpush1.xpose.msra.mxu0 0.0
    %343 = vmatprep.subr.mxu0 0.0
    %344 = vmatpush1.xpose.msra.mxu0 0.0
    %345 = vmatprep.subr.mxu0 0.0
    %346 = vmatpush1.xpose.msra.mxu0 0.0
    %347 = vmatprep.subr.mxu0 0.0
    %348 = vmatpush1.xpose.msra.mxu0 0.0
    %349 = vmatprep.subr.mxu0 0.0
    %350 = vmatpush1.xpose.msra.mxu0 0.0
    %351 = vmatprep.subr.mxu0 0.0
    %352 = vmatpush1.xpose.msra.mxu0 0.0
    %353 = vmatprep.subr.mxu0 0.0
    %354 = vmatpush1.xpose.msra.mxu0 0.0
    %355 = vmatprep.subr.mxu0 0.0
    %356 = vmatpush1.xpose.msra.mxu0 0.0
    %357 = vmatprep.subr.mxu0 0.0
    %358 = vmatpush1.xpose.msra.mxu0 0.0
    %359 = vmatprep.subr.mxu0 0.0
    %360 = vmatpush1.xpose.msra.mxu0 0.0
    %361 = vmatprep.subr.mxu0 0.0
    %362 = vmatpush1.xpose.msra.mxu0 0.0
    %363 = vmatprep.subr.mxu0 0.0
    %364 = vmatpush1.xpose.msra.mxu0 0.0
    %365 = vmatprep.subr.mxu0 0.0
    %366 = vmatpush1.xpose.msra.mxu0 0.0
    %367 = vmatprep.subr.mxu0 0.0
    %368 = vmatpush1.xpose.msra.mxu0 0.0
    %369 = vmatprep.subr.mxu0 0.0
    %370 = vmatpush1.xpose.msra.mxu0 0.0
    %371 = vmatprep.subr.mxu0 0.0
    %372 = vmatpush1.xpose.msra.mxu0 0.0
    %373 = vmatprep.mubr.f32.mxu0 0.0
    %374 = vmatmul.mubr.f32.gmra.mrb[0].mxu0 %v303
    %v375 = vpop.f32.mrb[0].mxu0
    %v376 = vadd.f32 0.0, %v375
    %v377 = vpop.f32.mrb[0].mxu0
    %378 = vmatprep.mubr.f32.mxu0 0.0
    %379 = vmatmul.mubr.f32.gmra.mrb[0].mxu0 %v305
    %v380 = vpop.f32.mrb[0].mxu0
    %v381 = vadd.f32 0.0, %v380
    %v382 = vpop.f32.mrb[0].mxu0
    %383 = vdwg.mxu0
    %v384 = vmul.f32 %v376, 0.25
    %v385 = vmul.f32 %v381, 0.25
    %v386 = vsel %vm288, %v384, -inf
    %v387 = vsel %vm288, %v385, -inf
    %vm388 = vcmask 64512
    %v389 = vsel %vm388, %v386, -inf
    %390 = vmax.xlane.f32.xlu0 %v389
    %v391 = vpop.xlane.xlu0 %390
    %v392 = vsel %vm388, %v387, -inf
    %393 = vmax.xlane.f32.xlu0 %v392
    %v394 = vpop.xlane.xlu0 %393
    %v395 = vsub.f32 %v386, %v391
    %v396 = vsub.f32 %v387, %v394
    %v397 = vmul.f32 %v395, 1.442695
    %v398 = vpow.pop %v397
    %v399 = vmul.f32 %v396, 1.442695
    %v400 = vpow.pop %v399
    %v401 = vsel %vm388, %v398, 0.0
    %402 = vadd.xlane.f32.xlu0 %v401
    %v403 = vpop.xlane.xlu0 %402
    %v404 = vsel %vm388, %v400, 0.0
    %405 = vadd.xlane.f32.xlu0 %v404
    %v406 = vpop.xlane.xlu0 %405
    %v407 = vrcp.pop %v403
    %v408 = vrcp.pop %v406
    %v409 = vmul.f32 %v398, %v407
    %v410 = vmul.f32 %v400, %v408
    %v412 = vsel %vm388, %v409, 0
    %v415 = vsel %vm388, %v410, 0
    %417 = vmatprep.subr.mxu0 0.0
    %418 = vmatpush1.msra.mxu0 %v266
    %419 = vmatprep.subr.mxu0 0.0
    %420 = vmatpush1.msra.mxu0 0.0
    %421 = vmatprep.subr.mxu0 0.0
    %422 = vmatpush1.msra.mxu0 0.0
    %423 = vmatprep.subr.mxu0 0.0
    %424 = vmatpush1.msra.mxu0 0.0
    %425 = vmatprep.subr.mxu0 0.0
    %426 = vmatpush1.msra.mxu0 0.0
    %427 = vmatprep.subr.mxu0 0.0
    %428 = vmatpush1.msra.mxu0 0.0
    %429 = vmatprep.subr.mxu0 0.0
    %430 = vmatpush1.msra.mxu0 0.0
    %431 = vmatprep.subr.mxu0 0.0
    %432 = vmatpush1.msra.mxu0 0.0
    %433 = vmatprep.subr.mxu0 0.0
    %434 = vmatpush1.msra.mxu0 0.0
    %435 = vmatprep.subr.mxu0 0.0
    %436 = vmatpush1.msra.mxu0 0.0
    %437 = vmatprep.subr.mxu0 0.0
    %438 = vmatpush1.msra.mxu0 0.0
    %439 = vmatprep.subr.mxu0 0.0
    %440 = vmatpush1.msra.mxu0 0.0
    %441 = vmatprep.subr.mxu0 0.0
    %442 = vmatpush1.msra.mxu0 0.0
    %443 = vmatprep.subr.mxu0 0.0
    %444 = vmatpush1.msra.mxu0 0.0
    %445 = vmatprep.subr.mxu0 0.0
    %446 = vmatpush1.msra.mxu0 0.0
    %447 = vmatprep.subr.mxu0 0.0
    %448 = vmatpush1.msra.mxu0 0.0
    %449 = vmatprep.subr.mxu0 0.0
    %450 = vmatpush1.msra.mxu0 0.0
    %451 = vmatprep.subr.mxu0 0.0
    %452 = vmatpush1.msra.mxu0 0.0
    %453 = vmatprep.subr.mxu0 0.0
    %454 = vmatpush1.msra.mxu0 0.0
    %455 = vmatprep.subr.mxu0 0.0
    %456 = vmatpush1.msra.mxu0 0.0
    %457 = vmatprep.subr.mxu0 0.0
    %458 = vmatpush1.msra.mxu0 0.0
    %459 = vmatprep.subr.mxu0 0.0
    %460 = vmatpush1.msra.mxu0 0.0
    %461 = vmatprep.subr.mxu0 0.0
    %462 = vmatpush1.msra.mxu0 0.0
    %463 = vmatprep.subr.mxu0 0.0
    %464 = vmatpush1.msra.mxu0 0.0
    %465 = vmatprep.subr.mxu0 0.0
    %466 = vmatpush1.msra.mxu0 0.0
    %467 = vmatprep.subr.mxu0 0.0
    %468 = vmatpush1.msra.mxu0 0.0
    %469 = vmatprep.subr.mxu0 0.0
    %470 = vmatpush1.msra.mxu0 0.0
    %471 = vmatprep.subr.mxu0 0.0
    %472 = vmatpush1.msra.mxu0 0.0
    %473 = vmatprep.subr.mxu0 0.0
    %474 = vmatpush1.msra.mxu0 0.0
    %475 = vmatprep.subr.mxu0 0.0
    %476 = vmatpush1.msra.mxu0 0.0
    %477 = vmatprep.subr.mxu0 0.0
    %478 = vmatpush1.msra.mxu0 0.0
    %479 = vmatprep.subr.mxu0 0.0
    %480 = vmatpush1.msra.mxu0 0.0
    %481 = vmatprep.mubr.f32.mxu0 0.0
    %482 = vmatmul.mubr.f32.gmra.mrb[0].mxu0 %v412
    %v483 = vpop.f32.mrb[0].mxu0
    %v484 = vadd.f32 0.0, %v483
    %v485 = vpop.f32.mrb[0].mxu0
    %486 = vmatprep.mubr.f32.mxu0 0.0
    %487 = vmatmul.mubr.f32.gmra.mrb[0].mxu0 %v415
    %v488 = vpop.f32.mrb[0].mxu0
    %v489 = vadd.f32 0.0, %v488
    %v490 = vpop.f32.mrb[0].mxu0
    %491 = vdwg.mxu0
    %v493 = vsel %vm302, %v489, 0
    %495 = vmatprep.subr.mxu0 0.0
    %496 = vmatpush1.msra.mxu0 %v291
    %497 = vmatprep.subr.mxu0 0.0
    %498 = vmatpush1.msra.mxu0 %v292
    %499 = vmatprep.subr.mxu0 0.0
    %500 = vmatpush1.msra.mxu0 0.0
    %501 = vmatprep.subr.mxu0 0.0
    %502 = vmatpush1.msra.mxu0 0.0
    %503 = vmatprep.subr.mxu0 0.0
    %504 = vmatpush1.msra.mxu0 0.0
    %505 = vmatprep.subr.mxu0 0.0
    %506 = vmatpush1.msra.mxu0 0.0
    %507 = vmatprep.subr.mxu0 0.0
    %508 = vmatpush1.msra.mxu0 0.0
    %509 = vmatprep.subr.mxu0 0.0
    %510 = vmatpush1.msra.mxu0 0.0
    %511 = vmatprep.subr.mxu0 0.0
    %512 = vmatpush1.msra.mxu0 0.0
    %513 = vmatprep.subr.mxu0 0.0
    %514 = vmatpush1.msra.mxu0 0.0
    %515 = vmatprep.subr.mxu0 0.0
    %516 = vmatpush1.msra.mxu0 0.0
    %517 = vmatprep.subr.mxu0 0.0
    %518 = vmatpush1.msra.mxu0 0.0
    %519 = vmatprep.subr.mxu0 0.0
    %520 = vmatpush1.msra.mxu0 0.0
    %521 = vmatprep.subr.mxu0 0.0
    %522 = vmatpush1.msra.mxu0 0.0
    %523 = vmatprep.subr.mxu0 0.0
    %524 = vmatpush1.msra.mxu0 0.0
    %525 = vmatprep.subr.mxu0 0.0
    %526 = vmatpush1.msra.mxu0 0.0
    %527 = vmatprep.subr.mxu0 0.0
    %528 = vmatpush1.msra.mxu0 0.0
    %529 = vmatprep.subr.mxu0 0.0
    %530 = vmatpush1.msra.mxu0 0.0
    %531 = vmatprep.subr.mxu0 0.0
    %532 = vmatpush1.msra.mxu0 0.0
    %533 = vmatprep.subr.mxu0 0.0
    %534 = vmatpush1.msra.mxu0 0.0
    %535 = vmatprep.subr.mxu0 0.0
    %536 = vmatpush1.msra.mxu0 0.0
    %537 = vmatprep.subr.mxu0 0.0
    %538 = vmatpush1.msra.mxu0 0.0
    %539 = vmatprep.subr.mxu0 0.0
    %540 = vmatpush1.msra.mxu0 0.0
    %541 = vmatprep.subr.mxu0 0.0
    %542 = vmatpush1.msra.mxu0 0.0
    %543 = vmatprep.subr.mxu0 0.0
    %544 = vmatpush1.msra.mxu0 0.0
    %545 = vmatprep.subr.mxu0 0.0
    %546 = vmatpush1.msra.mxu0 0.0
    %547 = vmatprep.subr.mxu0 0.0
    %548 = vmatpush1.msra.mxu0 0.0
    %549 = vmatprep.subr.mxu0 0.0
    %550 = vmatpush1.msra.mxu0 0.0
    %551 = vmatprep.subr.mxu0 0.0
    %552 = vmatpush1.msra.mxu0 0.0
    %553 = vmatprep.subr.mxu0 0.0
    %554 = vmatpush1.msra.mxu0 0.0
    %555 = vmatprep.subr.mxu0 0.0
    %556 = vmatpush1.msra.mxu0 0.0
    %557 = vmatprep.subr.mxu0 0.0
    %558 = vmatpush1.msra.mxu0 0.0
    %559 = vmatprep.mubr.f32.mxu0 0.0
    %560 = vmatmul.mubr.f32.gmra.mrb[0].mxu0 %v493
    %v561 = vpop.f32.mrb[0].mxu0
    %v562 = vadd.f32 0.0, %v561
    %v563 = vpop.f32.mrb[0].mxu0
    %564 = vdwg.mxu0
    %v566 = vsel %vm302, %v484, 0
    %568 = vmatprep.subr.mxu0 0.0
    %569 = vmatpush1.msra.mxu0 %v289
    %570 = vmatprep.subr.mxu0 0.0
    %571 = vmatpush1.msra.mxu0 %v290
    %572 = vmatprep.subr.mxu0 0.0
    %573 = vmatpush1.msra.mxu0 0.0
    %574 = vmatprep.subr.mxu0 0.0
    %575 = vmatpush1.msra.mxu0 0.0
    %576 = vmatprep.subr.mxu0 0.0
    %577 = vmatpush1.msra.mxu0 0.0
    %578 = vmatprep.subr.mxu0 0.0
    %579 = vmatpush1.msra.mxu0 0.0
    %580 = vmatprep.subr.mxu0 0.0
    %581 = vmatpush1.msra.mxu0 0.0
    %582 = vmatprep.subr.mxu0 0.0
    %583 = vmatpush1.msra.mxu0 0.0
    %584 = vmatprep.subr.mxu0 0.0
    %585 = vmatpush1.msra.mxu0 0.0
    %586 = vmatprep.subr.mxu0 0.0
    %587 = vmatpush1.msra.mxu0 0.0
    %588 = vmatprep.subr.mxu0 0.0
    %589 = vmatpush1.msra.mxu0 0.0
    %590 = vmatprep.subr.mxu0 0.0
    %591 = vmatpush1.msra.mxu0 0.0
    %592 = vmatprep.subr.mxu0 0.0
    %593 = vmatpush1.msra.mxu0 0.0
    %594 = vmatprep.subr.mxu0 0.0
    %595 = vmatpush1.msra.mxu0 0.0
    %596 = vmatprep.subr.mxu0 0.0
    %597 = vmatpush1.msra.mxu0 0.0
    %598 = vmatprep.subr.mxu0 0.0
    %599 = vmatpush1.msra.mxu0 0.0
    %600 = vmatprep.subr.mxu0 0.0
    %601 = vmatpush1.msra.mxu0 0.0
    %602 = vmatprep.subr.mxu0 0.0
    %603 = vmatpush1.msra.mxu0 0.0
    %604 = vmatprep.subr.mxu0 0.0
    %605 = vmatpush1.msra.mxu0 0.0
    %606 = vmatprep.subr.mxu0 0.0
    %607 = vmatpush1.msra.mxu0 0.0
    %608 = vmatprep.subr.mxu0 0.0
    %609 = vmatpush1.msra.mxu0 0.0
    %610 = vmatprep.subr.mxu0 0.0
    %611 = vmatpush1.msra.mxu0 0.0
    %612 = vmatprep.subr.mxu0 0.0
    %613 = vmatpush1.msra.mxu0 0.0
    %614 = vmatprep.subr.mxu0 0.0
    %615 = vmatpush1.msra.mxu0 0.0
    %616 = vmatprep.subr.mxu0 0.0
    %617 = vmatpush1.msra.mxu0 0.0
    %618 = vmatprep.subr.mxu0 0.0
    %619 = vmatpush1.msra.mxu0 0.0
    %620 = vmatprep.subr.mxu0 0.0
    %621 = vmatpush1.msra.mxu0 0.0
    %622 = vmatprep.subr.mxu0 0.0
    %623 = vmatpush1.msra.mxu0 0.0
    %624 = vmatprep.subr.mxu0 0.0
    %625 = vmatpush1.msra.mxu0 0.0
    %626 = vmatprep.subr.mxu0 0.0
    %627 = vmatpush1.msra.mxu0 0.0
    %628 = vmatprep.subr.mxu0 0.0
    %629 = vmatpush1.msra.mxu0 0.0
    %630 = vmatprep.subr.mxu0 0.0
    %631 = vmatpush1.msra.mxu0 0.0
    %632 = vmatprep.mubr.f32.mxu0 0.0
    %633 = vmatmul.mubr.f32.gmra.mrb[0].mxu0 %v566
    %v634 = vpop.f32.mrb[0].mxu0
    %v635 = vadd.f32 %v562, %v634
    %v636 = vpop.f32.mrb[0].mxu0
    %637 = vdwg.mxu0
    %638 = vrot.lane.b32.xlu0 %v282, 96
    %v639 = vpop.permute.xlu0 %638
    %640 = vrot.lane.b32.xlu0 %v299, 96
    %v641 = vpop.permute.xlu0 %640
    %642 = vrot.lane.b32.xlu0 %v282, 48
    %v643 = vpop.permute.xlu0 %642
    %v644 = vsel %vm302, %v639, 0
    %v646 = vsel %vm302, %v641, 0
    %v648 = vsel %vm302, %v643, 0
    %650 = vmatprep.subr.mxu0 0.0
    %651 = vmatpush1.xpose.msra.mxu0 %v648
    %652 = vmatprep.subr.mxu0 0.0
    %653 = vmatpush1.xpose.msra.mxu0 0.0
    %654 = vmatprep.subr.mxu0 0.0
    %655 = vmatpush1.xpose.msra.mxu0 0.0
    %656 = vmatprep.subr.mxu0 0.0
    %657 = vmatpush1.xpose.msra.mxu0 0.0
    %658 = vmatprep.subr.mxu0 0.0
    %659 = vmatpush1.xpose.msra.mxu0 0.0
    %660 = vmatprep.subr.mxu0 0.0
    %661 = vmatpush1.xpose.msra.mxu0 0.0
    %662 = vmatprep.subr.mxu0 0.0
    %663 = vmatpush1.xpose.msra.mxu0 0.0
    %664 = vmatprep.subr.mxu0 0.0
    %665 = vmatpush1.xpose.msra.mxu0 0.0
    %666 = vmatprep.subr.mxu0 0.0
    %667 = vmatpush1.xpose.msra.mxu0 0.0
    %668 = vmatprep.subr.mxu0 0.0
    %669 = vmatpush1.xpose.msra.mxu0 0.0
    %670 = vmatprep.subr.mxu0 0.0
    %671 = vmatpush1.xpose.msra.mxu0 0.0
    %672 = vmatprep.subr.mxu0 0.0
    %673 = vmatpush1.xpose.msra.mxu0 0.0
    %674 = vmatprep.subr.mxu0 0.0
    %675 = vmatpush1.xpose.msra.mxu0 0.0
    %676 = vmatprep.subr.mxu0 0.0
    %677 = vmatpush1.xpose.msra.mxu0 0.0
    %678 = vmatprep.subr.mxu0 0.0
    %679 = vmatpush1.xpose.msra.mxu0 0.0
    %680 = vmatprep.subr.mxu0 0.0
    %681 = vmatpush1.xpose.msra.mxu0 0.0
    %682 = vmatprep.subr.mxu0 0.0
    %683 = vmatpush1.xpose.msra.mxu0 0.0
    %684 = vmatprep.subr.mxu0 0.0
    %685 = vmatpush1.xpose.msra.mxu0 0.0
    %686 = vmatprep.subr.mxu0 0.0
    %687 = vmatpush1.xpose.msra.mxu0 0.0
    %688 = vmatprep.subr.mxu0 0.0
    %689 = vmatpush1.xpose.msra.mxu0 0.0
    %690 = vmatprep.subr.mxu0 0.0
    %691 = vmatpush1.xpose.msra.mxu0 0.0
    %692 = vmatprep.subr.mxu0 0.0
    %693 = vmatpush1.xpose.msra.mxu0 0.0
    %694 = vmatprep.subr.mxu0 0.0
    %695 = vmatpush1.xpose.msra.mxu0 0.0
    %696 = vmatprep.subr.mxu0 0.0
    %697 = vmatpush1.xpose.msra.mxu0 0.0
    %698 = vmatprep.subr.mxu0 0.0
    %699 = vmatpush1.xpose.msra.mxu0 0.0
    %700 = vmatprep.subr.mxu0 0.0
    %701 = vmatpush1.xpose.msra.mxu0 0.0
    %702 = vmatprep.subr.mxu0 0.0
    %703 = vmatpush1.xpose.msra.mxu0 0.0
    %704 = vmatprep.subr.mxu0 0.0
    %705 = vmatpush1.xpose.msra.mxu0 0.0
    %706 = vmatprep.subr.mxu0 0.0
    %707 = vmatpush1.xpose.msra.mxu0 0.0
    %708 = vmatprep.subr.mxu0 0.0
    %709 = vmatpush1.xpose.msra.mxu0 0.0
    %710 = vmatprep.subr.mxu0 0.0
    %711 = vmatpush1.xpose.msra.mxu0 0.0
    %712 = vmatprep.subr.mxu0 0.0
    %713 = vmatpush1.xpose.msra.mxu0 0.0
    %714 = vmatprep.mubr.f32.mxu0 0.0
    %715 = vmatmul.mubr.f32.gmra.mrb[0].mxu0 %v644
    %v716 = vpop.f32.mrb[0].mxu0
    %v717 = vadd.f32 0.0, %v716
    %v718 = vpop.f32.mrb[0].mxu0
    %719 = vmatprep.mubr.f32.mxu0 0.0
    %720 = vmatmul.mubr.f32.gmra.mrb[0].mxu0 %v646
    %v721 = vpop.f32.mrb[0].mxu0
    %v722 = vadd.f32 0.0, %v721
    %v723 = vpop.f32.mrb[0].mxu0
    %724 = vdwg.mxu0
    %v725 = vmul.f32 %v717, 0.25
    %v726 = vmul.f32 %v722, 0.25
    %v727 = vsel %vm288, %v725, -inf
    %v728 = vsel %vm288, %v726, -inf
    %v729 = vsel %vm388, %v727, -inf
    %730 = vmax.xlane.f32.xlu0 %v729
    %v731 = vpop.xlane.xlu0 %730
    %v732 = vsel %vm388, %v728, -inf
    %733 = vmax.xlane.f32.xlu0 %v732
    %v734 = vpop.xlane.xlu0 %733
    %v735 = vsub.f32 %v727, %v731
    %v736 = vsub.f32 %v728, %v734
    %v737 = vmul.f32 %v735, 1.442695
    %v738 = vpow.pop %v737
    %v739 = vmul.f32 %v736, 1.442695
    %v740 = vpow.pop %v739
    %v741 = vsel %vm388, %v738, 0.0
    %742 = vadd.xlane.f32.xlu0 %v741
    %v743 = vpop.xlane.xlu0 %742
    %v744 = vsel %vm388, %v740, 0.0
    %745 = vadd.xlane.f32.xlu0 %v744
    %v746 = vpop.xlane.xlu0 %745
    %v747 = vrcp.pop %v743
    %v748 = vrcp.pop %v746
    %v749 = vmul.f32 %v738, %v747
    %v750 = vmul.f32 %v740, %v748
    %752 = vrot.lane.b32.xlu0 %v266, 112
    %v753 = vpop.permute.xlu0 %752
    %v756 = vsel %vm388, %v749, 0
    %v759 = vsel %vm388, %v750, 0
    %761 = vmatprep.subr.mxu0 0.0
    %762 = vmatpush1.msra.mxu0 %v753
    %763 = vmatprep.subr.mxu0 0.0
    %764 = vmatpush1.msra.mxu0 0.0
    %765 = vmatprep.subr.mxu0 0.0
    %766 = vmatpush1.msra.mxu0 0.0
    %767 = vmatprep.subr.mxu0 0.0
    %768 = vmatpush1.msra.mxu0 0.0
    %769 = vmatprep.subr.mxu0 0.0
    %770 = vmatpush1.msra.mxu0 0.0
    %771 = vmatprep.subr.mxu0 0.0
    %772 = vmatpush1.msra.mxu0 0.0
    %773 = vmatprep.subr.mxu0 0.0
    %774 = vmatpush1.msra.mxu0 0.0
    %775 = vmatprep.subr.mxu0 0.0
    %776 = vmatpush1.msra.mxu0 0.0
    %777 = vmatprep.subr.mxu0 0.0
    %778 = vmatpush1.msra.mxu0 0.0
    %779 = vmatprep.subr.mxu0 0.0
    %780 = vmatpush1.msra.mxu0 0.0
    %781 = vmatprep.subr.mxu0 0.0
    %782 = vmatpush1.msra.mxu0 0.0
    %783 = vmatprep.subr.mxu0 0.0
    %784 = vmatpush1.msra.mxu0 0.0
    %785 = vmatprep.subr.mxu0 0.0
    %786 = vmatpush1.msra.mxu0 0.0
    %787 = vmatprep.subr.mxu0 0.0
    %788 = vmatpush1.msra.mxu0 0.0
    %789 = vmatprep.subr.mxu0 0.0
    %790 = vmatpush1.msra.mxu0 0.0
    %791 = vmatprep.subr.mxu0 0.0
    %792 = vmatpush1.msra.mxu0 0.0
    %793 = vmatprep.subr.mxu0 0.0
    %794 = vmatpush1.msra.mxu0 0.0
    %795 = vmatprep.subr.mxu0 0.0
    %796 = vmatpush1.msra.mxu0 0.0
    %797 = vmatprep.subr.mxu0 0.0
    %798 = vmatpush1.msra.mxu0 0.0
    %799 = vmatprep.subr.mxu0 0.0
    %800 = vmatpush1.msra.mxu0 0.0
    %801 = vmatprep.subr.mxu0 0.0
    %802 = vmatpush1.msra.mxu0 0.0
    %803 = vmatprep.subr.mxu0 0.0
    %804 = vmatpush1.msra.mxu0 0.0
    %805 = vmatprep.subr.mxu0 0.0
    %806 = vmatpush1.msra.mxu0 0.0
    %807 = vmatprep.subr.mxu0 0.0
    %808 = vmatpush1.msra.mxu0 0.0
    %809 = vmatprep.subr.mxu0 0.0
    %810 = vmatpush1.msra.mxu0 0.0
    %811 = vmatprep.subr.mxu0 0.0
    %812 = vmatpush1.msra.mxu0 0.0
    %813 = vmatprep.subr.mxu0 0.0
    %814 = vmatpush1.msra.mxu0 0.0
    %815 = vmatprep.subr.mxu0 0.0
    %816 = vmatpush1.msra.mxu0 0.0
    %817 = vmatprep.subr.mxu0 0.0
    %818 = vmatpush1.msra.mxu0 0.0
    %819 = vmatprep.subr.mxu0 0.0
    %820 = vmatpush1.msra.mxu0 0.0
    %821 = vmatprep.subr.mxu0 0.0
    %822 = vmatpush1.msra.mxu0 0.0
    %823 = vmatprep.subr.mxu0 0.0
    %824 = vmatpush1.msra.mxu0 0.0
    %825 = vmatprep.mubr.f32.mxu0 0.0
    %826 = vmatmul.mubr.f32.gmra.mrb[0].mxu0 %v756
    %v827 = vpop.f32.mrb[0].mxu0
    %v828 = vadd.f32 0.0, %v827
    %v829 = vpop.f32.mrb[0].mxu0
    %830 = vmatprep.mubr.f32.mxu0 0.0
    %831 = vmatmul.mubr.f32.gmra.mrb[0].mxu0 %v759
    %v832 = vpop.f32.mrb[0].mxu0
    %v833 = vadd.f32 0.0, %v832
    %v834 = vpop.f32.mrb[0].mxu0
    %835 = vdwg.mxu0
    %v837 = vsel %vm302, %v828, 0
    %839 = vmatprep.subr.mxu0 0.0
    %840 = vmatpush1.msra.mxu0 %v293
    %841 = vmatprep.subr.mxu0 0.0
    %842 = vmatpush1.msra.mxu0 %v294
    %843 = vmatprep.subr.mxu0 0.0
    %844 = vmatpush1.msra.mxu0 0.0
    %845 = vmatprep.subr.mxu0 0.0
    %846 = vmatpush1.msra.mxu0 0.0
    %847 = vmatprep.subr.mxu0 0.0
    %848 = vmatpush1.msra.mxu0 0.0
    %849 = vmatprep.subr.mxu0 0.0
    %850 = vmatpush1.msra.mxu0 0.0
    %851 = vmatprep.subr.mxu0 0.0
    %852 = vmatpush1.msra.mxu0 0.0
    %853 = vmatprep.subr.mxu0 0.0
    %854 = vmatpush1.msra.mxu0 0.0
    %855 = vmatprep.subr.mxu0 0.0
    %856 = vmatpush1.msra.mxu0 0.0
    %857 = vmatprep.subr.mxu0 0.0
    %858 = vmatpush1.msra.mxu0 0.0
    %859 = vmatprep.subr.mxu0 0.0
    %860 = vmatpush1.msra.mxu0 0.0
    %861 = vmatprep.subr.mxu0 0.0
    %862 = vmatpush1.msra.mxu0 0.0
    %863 = vmatprep.subr.mxu0 0.0
    %864 = vmatpush1.msra.mxu0 0.0
    %865 = vmatprep.subr.mxu0 0.0
    %866 = vmatpush1.msra.mxu0 0.0
    %867 = vmatprep.subr.mxu0 0.0
    %868 = vmatpush1.msra.mxu0 0.0
    %869 = vmatprep.subr.mxu0 0.0
    %870 = vmatpush1.msra.mxu0 0.0
    %871 = vmatprep.subr.mxu0 0.0
    %872 = vmatpush1.msra.mxu0 0.0
    %873 = vmatprep.subr.mxu0 0.0
    %874 = vmatpush1.msra.mxu0 0.0
    %875 = vmatprep.subr.mxu0 0.0
    %876 = vmatpush1.msra.mxu0 0.0
    %877 = vmatprep.subr.mxu0 0.0
    %878 = vmatpush1.msra.mxu0 0.0
    %879 = vmatprep.subr.mxu0 0.0
    %880 = vmatpush1.msra.mxu0 0.0
    %881 = vmatprep.subr.mxu0 0.0
    %882 = vmatpush1.msra.mxu0 0.0
    %883 = vmatprep.subr.mxu0 0.0
    %884 = vmatpush1.msra.mxu0 0.0
    %885 = vmatprep.subr.mxu0 0.0
    %886 = vmatpush1.msra.mxu0 0.0
    %887 = vmatprep.subr.mxu0 0.0
    %888 = vmatpush1.msra.mxu0 0.0
    %889 = vmatprep.subr.mxu0 0.0
    %890 = vmatpush1.msra.mxu0 0.0
    %891 = vmatprep.subr.mxu0 0.0
    %892 = vmatpush1.msra.mxu0 0.0
    %893 = vmatprep.subr.mxu0 0.0
    %894 = vmatpush1.msra.mxu0 0.0
    %895 = vmatprep.subr.mxu0 0.0
    %896 = vmatpush1.msra.mxu0 0.0
    %897 = vmatprep.subr.mxu0 0.0
    %898 = vmatpush1.msra.mxu0 0.0
    %899 = vmatprep.subr.mxu0 0.0
    %900 = vmatpush1.msra.mxu0 0.0
    %901 = vmatprep.subr.mxu0 0.0
    %902 = vmatpush1.msra.mxu0 0.0
    %903 = vmatprep.mubr.f32.mxu0 0.0
    %904 = vmatmul.mubr.f32.gmra.mrb[0].mxu0 %v837
    %v905 = vpop.f32.mrb[0].mxu0
    %v906 = vadd.f32 0.0, %v905
    %v907 = vpop.f32.mrb[0].mxu0
    %908 = vdwg.mxu0
    %v909 = vadd.f32 %v635, %v906
    %v911 = vsel %vm302, %v833, 0
    %913 = vmatprep.subr.mxu0 0.0
    %914 = vmatpush1.msra.mxu0 %v295
    %915 = vmatprep.subr.mxu0 0.0
    %916 = vmatpush1.msra.mxu0 %v296
    %917 = vmatprep.subr.mxu0 0.0
    %918 = vmatpush1.msra.mxu0 0.0
    %919 = vmatprep.subr.mxu0 0.0
    %920 = vmatpush1.msra.mxu0 0.0
    %921 = vmatprep.subr.mxu0 0.0
    %922 = vmatpush1.msra.mxu0 0.0
    %923 = vmatprep.subr.mxu0 0.0
    %924 = vmatpush1.msra.mxu0 0.0
    %925 = vmatprep.subr.mxu0 0.0
    %926 = vmatpush1.msra.mxu0 0.0
    %927 = vmatprep.subr.mxu0 0.0
    %928 = vmatpush1.msra.mxu0 0.0
    %929 = vmatprep.subr.mxu0 0.0
    %930 = vmatpush1.msra.mxu0 0.0
    %931 = vmatprep.subr.mxu0 0.0
    %932 = vmatpush1.msra.mxu0 0.0
    %933 = vmatprep.subr.mxu0 0.0
    %934 = vmatpush1.msra.mxu0 0.0
    %935 = vmatprep.subr.mxu0 0.0
    %936 = vmatpush1.msra.mxu0 0.0
    %937 = vmatprep.subr.mxu0 0.0
    %938 = vmatpush1.msra.mxu0 0.0
    %939 = vmatprep.subr.mxu0 0.0
    %940 = vmatpush1.msra.mxu0 0.0
    %941 = vmatprep.subr.mxu0 0.0
    %942 = vmatpush1.msra.mxu0 0.0
    %943 = vmatprep.subr.mxu0 0.0
    %944 = vmatpush1.msra.mxu0 0.0
    %945 = vmatprep.subr.mxu0 0.0
    %946 = vmatpush1.msra.mxu0 0.0
    %947 = vmatprep.subr.mxu0 0.0
    %948 = vmatpush1.msra.mxu0 0.0
    %949 = vmatprep.subr.mxu0 0.0
    %950 = vmatpush1.msra.mxu0 0.0
    %951 = vmatprep.subr.mxu0 0.0
    %952 = vmatpush1.msra.mxu0 0.0
    %953 = vmatprep.subr.mxu0 0.0
    %954 = vmatpush1.msra.mxu0 0.0
    %955 = vmatprep.subr.mxu0 0.0
    %956 = vmatpush1.msra.mxu0 0.0
    %957 = vmatprep.subr.mxu0 0.0
    %958 = vmatpush1.msra.mxu0 0.0
    %959 = vmatprep.subr.mxu0 0.0
    %960 = vmatpush1.msra.mxu0 0.0
    %961 = vmatprep.subr.mxu0 0.0
    %962 = vmatpush1.msra.mxu0 0.0
    %963 = vmatprep.subr.mxu0 0.0
    %964 = vmatpush1.msra.mxu0 0.0
    %965 = vmatprep.subr.mxu0 0.0
    %966 = vmatpush1.msra.mxu0 0.0
    %967 = vmatprep.subr.mxu0 0.0
    %968 = vmatpush1.msra.mxu0 0.0
    %969 = vmatprep.subr.mxu0 0.0
    %970 = vmatpush1.msra.mxu0 0.0
    %971 = vmatprep.subr.mxu0 0.0
    %972 = vmatpush1.msra.mxu0 0.0
    %973 = vmatprep.subr.mxu0 0.0
    %974 = vmatpush1.msra.mxu0 0.0
    %975 = vmatprep.subr.mxu0 0.0
    %976 = vmatpush1.msra.mxu0 0.0
    %977 = vmatprep.mubr.f32.mxu0 0.0
    %978 = vmatmul.mubr.f32.gmra.mrb[0].mxu0 %v911
    %v979 = vpop.f32.mrb[0].mxu0
    %v980 = vadd.f32 0.0, %v979
    %v981 = vpop.f32.mrb[0].mxu0
    %982 = vdwg.mxu0
    %v983 = vadd.f32 %v909, %v980
    %984 = vst.msk [vmem:[#allocation11] sm:$0xff] %vm115, %v983
    %986 = vrot.lane.b32.xlu0 %v283, 112
    %v987 = vpop.permute.xlu0 %986
    %988 = vrot.lane.b32.xlu0 %v283, 64
    %v989 = vpop.permute.xlu0 %988
    %v990 = vsel %vm302, %v283, 0
    %v992 = vsel %vm302, %v987, 0
    %v994 = vsel %vm302, %v989, 0
    %996 = vmatprep.subr.mxu0 0.0
    %997 = vmatpush1.xpose.msra.mxu0 %v994
    %998 = vmatprep.subr.mxu0 0.0
    %999 = vmatpush1.xpose.msra.mxu0 0.0
    %1000 = vmatprep.subr.mxu0 0.0
    %1001 = vmatpush1.xpose.msra.mxu0 0.0
    %1002 = vmatprep.subr.mxu0 0.0
    %1003 = vmatpush1.xpose.msra.mxu0 0.0
    %1004 = vmatprep.subr.mxu0 0.0
    %1005 = vmatpush1.xpose.msra.mxu0 0.0
    %1006 = vmatprep.subr.mxu0 0.0
    %1007 = vmatpush1.xpose.msra.mxu0 0.0
    %1008 = vmatprep.subr.mxu0 0.0
    %1009 = vmatpush1.xpose.msra.mxu0 0.0
    %1010 = vmatprep.subr.mxu0 0.0
    %1011 = vmatpush1.xpose.msra.mxu0 0.0
    %1012 = vmatprep.subr.mxu0 0.0
    %1013 = vmatpush1.xpose.msra.mxu0 0.0
    %1014 = vmatprep.subr.mxu0 0.0
    %1015 = vmatpush1.xpose.msra.mxu0 0.0
    %1016 = vmatprep.subr.mxu0 0.0
    %1017 = vmatpush1.xpose.msra.mxu0 0.0
    %1018 = vmatprep.subr.mxu0 0.0
    %1019 = vmatpush1.xpose.msra.mxu0 0.0
    %1020 = vmatprep.subr.mxu0 0.0
    %1021 = vmatpush1.xpose.msra.mxu0 0.0
    %1022 = vmatprep.subr.mxu0 0.0
    %1023 = vmatpush1.xpose.msra.mxu0 0.0
    %1024 = vmatprep.subr.mxu0 0.0
    %1025 = vmatpush1.xpose.msra.mxu0 0.0
    %1026 = vmatprep.subr.mxu0 0.0
    %1027 = vmatpush1.xpose.msra.mxu0 0.0
    %1028 = vmatprep.subr.mxu0 0.0
    %1029 = vmatpush1.xpose.msra.mxu0 0.0
    %1030 = vmatprep.subr.mxu0 0.0
    %1031 = vmatpush1.xpose.msra.mxu0 0.0
    %1032 = vmatprep.subr.mxu0 0.0
    %1033 = vmatpush1.xpose.msra.mxu0 0.0
    %1034 = vmatprep.subr.mxu0 0.0
    %1035 = vmatpush1.xpose.msra.mxu0 0.0
    %1036 = vmatprep.subr.mxu0 0.0
    %1037 = vmatpush1.xpose.msra.mxu0 0.0
    %1038 = vmatprep.subr.mxu0 0.0
    %1039 = vmatpush1.xpose.msra.mxu0 0.0
    %1040 = vmatprep.subr.mxu0 0.0
    %1041 = vmatpush1.xpose.msra.mxu0 0.0
    %1042 = vmatprep.subr.mxu0 0.0
    %1043 = vmatpush1.xpose.msra.mxu0 0.0
    %1044 = vmatprep.subr.mxu0 0.0
    %1045 = vmatpush1.xpose.msra.mxu0 0.0
    %1046 = vmatprep.subr.mxu0 0.0
    %1047 = vmatpush1.xpose.msra.mxu0 0.0
    %1048 = vmatprep.subr.mxu0 0.0
    %1049 = vmatpush1.xpose.msra.mxu0 0.0
    %1050 = vmatprep.subr.mxu0 0.0
    %1051 = vmatpush1.xpose.msra.mxu0 0.0
    %1052 = vmatprep.subr.mxu0 0.0
    %1053 = vmatpush1.xpose.msra.mxu0 0.0
    %1054 = vmatprep.subr.mxu0 0.0
    %1055 = vmatpush1.xpose.msra.mxu0 0.0
    %1056 = vmatprep.subr.mxu0 0.0
    %1057 = vmatpush1.xpose.msra.mxu0 0.0
    %1058 = vmatprep.subr.mxu0 0.0
    %1059 = vmatpush1.xpose.msra.mxu0 0.0
    %1060 = vmatprep.mubr.f32.mxu0 0.0
    %1061 = vmatmul.mubr.f32.gmra.mrb[0].mxu0 %v990
    %v1062 = vpop.f32.mrb[0].mxu0
    %v1063 = vadd.f32 0.0, %v1062
    %v1064 = vpop.f32.mrb[0].mxu0
    %1065 = vmatprep.mubr.f32.mxu0 0.0
    %1066 = vmatmul.mubr.f32.gmra.mrb[0].mxu0 %v992
    %v1067 = vpop.f32.mrb[0].mxu0
    %v1068 = vadd.f32 0.0, %v1067
    %v1069 = vpop.f32.mrb[0].mxu0
    %1070 = vdwg.mxu0
    %v1071 = vmul.f32 %v1063, 0.25
    %v1072 = vmul.f32 %v1068, 0.25
    %v1073 = vsel %vm288, %v1071, -inf
    %v1074 = vsel %vm288, %v1072, -inf
    %v1075 = vsel %vm388, %v1073, -inf
    %1076 = vmax.xlane.f32.xlu0 %v1075
    %v1077 = vpop.xlane.xlu0 %1076
    %v1078 = vsel %vm388, %v1074, -inf
    %1079 = vmax.xlane.f32.xlu0 %v1078
    %v1080 = vpop.xlane.xlu0 %1079
    %v1081 = vsub.f32 %v1073, %v1077
    %v1082 = vsub.f32 %v1074, %v1080
    %v1083 = vmul.f32 %v1081, 1.442695
    %v1084 = vpow.pop %v1083
    %v1085 = vmul.f32 %v1082, 1.442695
    %v1086 = vpow.pop %v1085
    %v1087 = vsel %vm388, %v1084, 0.0
    %1088 = vadd.xlane.f32.xlu0 %v1087
    %v1089 = vpop.xlane.xlu0 %1088
    %v1090 = vsel %vm388, %v1086, 0.0
    %1091 = vadd.xlane.f32.xlu0 %v1090
    %v1092 = vpop.xlane.xlu0 %1091
    %v1093 = vrcp.pop %v1089
    %v1094 = vrcp.pop %v1092
    %v1095 = vmul.f32 %v1084, %v1093
    %v1096 = vmul.f32 %v1086, %v1094
    %v1098 = vsel %vm388, %v1095, 0
    %v1101 = vsel %vm388, %v1096, 0
    %1103 = vmatprep.subr.mxu0 0.0
    %1104 = vmatpush1.msra.mxu0 %v271
    %1105 = vmatprep.subr.mxu0 0.0
    %1106 = vmatpush1.msra.mxu0 0.0
    %1107 = vmatprep.subr.mxu0 0.0
    %1108 = vmatpush1.msra.mxu0 0.0
    %1109 = vmatprep.subr.mxu0 0.0
    %1110 = vmatpush1.msra.mxu0 0.0
    %1111 = vmatprep.subr.mxu0 0.0
    %1112 = vmatpush1.msra.mxu0 0.0
    %1113 = vmatprep.subr.mxu0 0.0
    %1114 = vmatpush1.msra.mxu0 0.0
    %1115 = vmatprep.subr.mxu0 0.0
    %1116 = vmatpush1.msra.mxu0 0.0
    %1117 = vmatprep.subr.mxu0 0.0
    %1118 = vmatpush1.msra.mxu0 0.0
    %1119 = vmatprep.subr.mxu0 0.0
    %1120 = vmatpush1.msra.mxu0 0.0
    %1121 = vmatprep.subr.mxu0 0.0
    %1122 = vmatpush1.msra.mxu0 0.0
    %1123 = vmatprep.subr.mxu0 0.0
    %1124 = vmatpush1.msra.mxu0 0.0
    %1125 = vmatprep.subr.mxu0 0.0
    %1126 = vmatpush1.msra.mxu0 0.0
    %1127 = vmatprep.subr.mxu0 0.0
    %1128 = vmatpush1.msra.mxu0 0.0
    %1129 = vmatprep.subr.mxu0 0.0
    %1130 = vmatpush1.msra.mxu0 0.0
    %1131 = vmatprep.subr.mxu0 0.0
    %1132 = vmatpush1.msra.mxu0 0.0
    %1133 = vmatprep.subr.mxu0 0.0
    %1134 = vmatpush1.msra.mxu0 0.0
    %1135 = vmatprep.subr.mxu0 0.0
    %1136 = vmatpush1.msra.mxu0 0.0
    %1137 = vmatprep.subr.mxu0 0.0
    %1138 = vmatpush1.msra.mxu0 0.0
    %1139 = vmatprep.subr.mxu0 0.0
    %1140 = vmatpush1.msra.mxu0 0.0
    %1141 = vmatprep.subr.mxu0 0.0
    %1142 = vmatpush1.msra.mxu0 0.0
    %1143 = vmatprep.subr.mxu0 0.0
    %1144 = vmatpush1.msra.mxu0 0.0
    %1145 = vmatprep.subr.mxu0 0.0
    %1146 = vmatpush1.msra.mxu0 0.0
    %1147 = vmatprep.subr.mxu0 0.0
    %1148 = vmatpush1.msra.mxu0 0.0
    %1149 = vmatprep.subr.mxu0 0.0
    %1150 = vmatpush1.msra.mxu0 0.0
    %1151 = vmatprep.subr.mxu0 0.0
    %1152 = vmatpush1.msra.mxu0 0.0
    %1153 = vmatprep.subr.mxu0 0.0
    %1154 = vmatpush1.msra.mxu0 0.0
    %1155 = vmatprep.subr.mxu0 0.0
    %1156 = vmatpush1.msra.mxu0 0.0
    %1157 = vmatprep.subr.mxu0 0.0
    %1158 = vmatpush1.msra.mxu0 0.0
    %1159 = vmatprep.subr.mxu0 0.0
    %1160 = vmatpush1.msra.mxu0 0.0
    %1161 = vmatprep.subr.mxu0 0.0
    %1162 = vmatpush1.msra.mxu0 0.0
    %1163 = vmatprep.subr.mxu0 0.0
    %1164 = vmatpush1.msra.mxu0 0.0
    %1165 = vmatprep.subr.mxu0 0.0
    %1166 = vmatpush1.msra.mxu0 0.0
    %1167 = vmatprep.mubr.f32.mxu0 0.0
    %1168 = vmatmul.mubr.f32.gmra.mrb[0].mxu0 %v1098
    %v1169 = vpop.f32.mrb[0].mxu0
    %v1170 = vadd.f32 0.0, %v1169
    %v1171 = vpop.f32.mrb[0].mxu0
    %1172 = vmatprep.mubr.f32.mxu0 0.0
    %1173 = vmatmul.mubr.f32.gmra.mrb[0].mxu0 %v1101
    %v1174 = vpop.f32.mrb[0].mxu0
    %v1175 = vadd.f32 0.0, %v1174
    %v1176 = vpop.f32.mrb[0].mxu0
    %1177 = vdwg.mxu0
    %v1179 = vsel %vm302, %v1175, 0
    %1181 = vmatprep.subr.mxu0 0.0
    %1182 = vmatpush1.msra.mxu0 %v291
    %1183 = vmatprep.subr.mxu0 0.0
    %1184 = vmatpush1.msra.mxu0 %v292
    %1185 = vmatprep.subr.mxu0 0.0
    %1186 = vmatpush1.msra.mxu0 0.0
    %1187 = vmatprep.subr.mxu0 0.0
    %1188 = vmatpush1.msra.mxu0 0.0
    %1189 = vmatprep.subr.mxu0 0.0
    %1190 = vmatpush1.msra.mxu0 0.0
    %1191 = vmatprep.subr.mxu0 0.0
    %1192 = vmatpush1.msra.mxu0 0.0
    %1193 = vmatprep.subr.mxu0 0.0
    %1194 = vmatpush1.msra.mxu0 0.0
    %1195 = vmatprep.subr.mxu0 0.0
    %1196 = vmatpush1.msra.mxu0 0.0
    %1197 = vmatprep.subr.mxu0 0.0
    %1198 = vmatpush1.msra.mxu0 0.0
    %1199 = vmatprep.subr.mxu0 0.0
    %1200 = vmatpush1.msra.mxu0 0.0
    %1201 = vmatprep.subr.mxu0 0.0
    %1202 = vmatpush1.msra.mxu0 0.0
    %1203 = vmatprep.subr.mxu0 0.0
    %1204 = vmatpush1.msra.mxu0 0.0
    %1205 = vmatprep.subr.mxu0 0.0
    %1206 = vmatpush1.msra.mxu0 0.0
    %1207 = vmatprep.subr.mxu0 0.0
    %1208 = vmatpush1.msra.mxu0 0.0
    %1209 = vmatprep.subr.mxu0 0.0
    %1210 = vmatpush1.msra.mxu0 0.0
    %1211 = vmatprep.subr.mxu0 0.0
    %1212 = vmatpush1.msra.mxu0 0.0
    %1213 = vmatprep.subr.mxu0 0.0
    %1214 = vmatpush1.msra.mxu0 0.0
    %1215 = vmatprep.subr.mxu0 0.0
    %1216 = vmatpush1.msra.mxu0 0.0
    %1217 = vmatprep.subr.mxu0 0.0
    %1218 = vmatpush1.msra.mxu0 0.0
    %1219 = vmatprep.subr.mxu0 0.0
    %1220 = vmatpush1.msra.mxu0 0.0
    %1221 = vmatprep.subr.mxu0 0.0
    %1222 = vmatpush1.msra.mxu0 0.0
    %1223 = vmatprep.subr.mxu0 0.0
    %1224 = vmatpush1.msra.mxu0 0.0
    %1225 = vmatprep.subr.mxu0 0.0
    %1226 = vmatpush1.msra.mxu0 0.0
    %1227 = vmatprep.subr.mxu0 0.0
    %1228 = vmatpush1.msra.mxu0 0.0
    %1229 = vmatprep.subr.mxu0 0.0
    %1230 = vmatpush1.msra.mxu0 0.0
    %1231 = vmatprep.subr.mxu0 0.0
    %1232 = vmatpush1.msra.mxu0 0.0
    %1233 = vmatprep.subr.mxu0 0.0
    %1234 = vmatpush1.msra.mxu0 0.0
    %1235 = vmatprep.subr.mxu0 0.0
    %1236 = vmatpush1.msra.mxu0 0.0
    %1237 = vmatprep.subr.mxu0 0.0
    %1238 = vmatpush1.msra.mxu0 0.0
    %1239 = vmatprep.subr.mxu0 0.0
    %1240 = vmatpush1.msra.mxu0 0.0
    %1241 = vmatprep.subr.mxu0 0.0
    %1242 = vmatpush1.msra.mxu0 0.0
    %1243 = vmatprep.subr.mxu0 0.0
    %1244 = vmatpush1.msra.mxu0 0.0
    %1245 = vmatprep.mubr.f32.mxu0 0.0
    %1246 = vmatmul.mubr.f32.gmra.mrb[0].mxu0 %v1179
    %v1247 = vpop.f32.mrb[0].mxu0
    %v1248 = vadd.f32 0.0, %v1247
    %v1249 = vpop.f32.mrb[0].mxu0
    %1250 = vdwg.mxu0
    %v1252 = vsel %vm302, %v1170, 0
    %1254 = vmatprep.subr.mxu0 0.0
    %1255 = vmatpush1.msra.mxu0 %v289
    %1256 = vmatprep.subr.mxu0 0.0
    %1257 = vmatpush1.msra.mxu0 %v290
    %1258 = vmatprep.subr.mxu0 0.0
    %1259 = vmatpush1.msra.mxu0 0.0
    %1260 = vmatprep.subr.mxu0 0.0
    %1261 = vmatpush1.msra.mxu0 0.0
    %1262 = vmatprep.subr.mxu0 0.0
    %1263 = vmatpush1.msra.mxu0 0.0
    %1264 = vmatprep.subr.mxu0 0.0
    %1265 = vmatpush1.msra.mxu0 0.0
    %1266 = vmatprep.subr.mxu0 0.0
    %1267 = vmatpush1.msra.mxu0 0.0
    %1268 = vmatprep.subr.mxu0 0.0
    %1269 = vmatpush1.msra.mxu0 0.0
    %1270 = vmatprep.subr.mxu0 0.0
    %1271 = vmatpush1.msra.mxu0 0.0
    %1272 = vmatprep.subr.mxu0 0.0
    %1273 = vmatpush1.msra.mxu0 0.0
    %1274 = vmatprep.subr.mxu0 0.0
    %1275 = vmatpush1.msra.mxu0 0.0
    %1276 = vmatprep.subr.mxu0 0.0
    %1277 = vmatpush1.msra.mxu0 0.0
    %1278 = vmatprep.subr.mxu0 0.0
    %1279 = vmatpush1.msra.mxu0 0.0
    %1280 = vmatprep.subr.mxu0 0.0
    %1281 = vmatpush1.msra.mxu0 0.0
    %1282 = vmatprep.subr.mxu0 0.0
    %1283 = vmatpush1.msra.mxu0 0.0
    %1284 = vmatprep.subr.mxu0 0.0
    %1285 = vmatpush1.msra.mxu0 0.0
    %1286 = vmatprep.subr.mxu0 0.0
    %1287 = vmatpush1.msra.mxu0 0.0
    %1288 = vmatprep.subr.mxu0 0.0
    %1289 = vmatpush1.msra.mxu0 0.0
    %1290 = vmatprep.subr.mxu0 0.0
    %1291 = vmatpush1.msra.mxu0 0.0
    %1292 = vmatprep.subr.mxu0 0.0
    %1293 = vmatpush1.msra.mxu0 0.0
    %1294 = vmatprep.subr.mxu0 0.0
    %1295 = vmatpush1.msra.mxu0 0.0
    %1296 = vmatprep.subr.mxu0 0.0
    %1297 = vmatpush1.msra.mxu0 0.0
    %1298 = vmatprep.subr.mxu0 0.0
    %1299 = vmatpush1.msra.mxu0 0.0
    %1300 = vmatprep.subr.mxu0 0.0
    %1301 = vmatpush1.msra.mxu0 0.0
    %1302 = vmatprep.subr.mxu0 0.0
    %1303 = vmatpush1.msra.mxu0 0.0
    %1304 = vmatprep.subr.mxu0 0.0
    %1305 = vmatpush1.msra.mxu0 0.0
    %1306 = vmatprep.subr.mxu0 0.0
    %1307 = vmatpush1.msra.mxu0 0.0
    %1308 = vmatprep.subr.mxu0 0.0
    %1309 = vmatpush1.msra.mxu0 0.0
    %1310 = vmatprep.subr.mxu0 0.0
    %1311 = vmatpush1.msra.mxu0 0.0
    %1312 = vmatprep.subr.mxu0 0.0
    %1313 = vmatpush1.msra.mxu0 0.0
    %1314 = vmatprep.subr.mxu0 0.0
    %1315 = vmatpush1.msra.mxu0 0.0
    %1316 = vmatprep.subr.mxu0 0.0
    %1317 = vmatpush1.msra.mxu0 0.0
    %1318 = vmatprep.mubr.f32.mxu0 0.0
    %1319 = vmatmul.mubr.f32.gmra.mrb[0].mxu0 %v1252
    %v1320 = vpop.f32.mrb[0].mxu0
    %v1321 = vadd.f32 %v1248, %v1320
    %v1322 = vpop.f32.mrb[0].mxu0
    %1323 = vdwg.mxu0
    %1324 = vrot.lane.b32.xlu0 %v283, 96
    %v1325 = vpop.permute.xlu0 %1324
    %1326 = vrot.lane.b32.xlu0 %v987, 96
    %v1327 = vpop.permute.xlu0 %1326
    %1328 = vrot.lane.b32.xlu0 %v283, 48
    %v1329 = vpop.permute.xlu0 %1328
    %v1330 = vsel %vm302, %v1325, 0
    %v1332 = vsel %vm302, %v1327, 0
    %v1334 = vsel %vm302, %v1329, 0
    %1336 = vmatprep.subr.mxu0 0.0
    %1337 = vmatpush1.xpose.msra.mxu0 %v1334
    %1338 = vmatprep.subr.mxu0 0.0
    %1339 = vmatpush1.xpose.msra.mxu0 0.0
    %1340 = vmatprep.subr.mxu0 0.0
    %1341 = vmatpush1.xpose.msra.mxu0 0.0
    %1342 = vmatprep.subr.mxu0 0.0
    %1343 = vmatpush1.xpose.msra.mxu0 0.0
    %1344 = vmatprep.subr.mxu0 0.0
    %1345 = vmatpush1.xpose.msra.mxu0 0.0
    %1346 = vmatprep.subr.mxu0 0.0
    %1347 = vmatpush1.xpose.msra.mxu0 0.0
    %1348 = vmatprep.subr.mxu0 0.0
    %1349 = vmatpush1.xpose.msra.mxu0 0.0
    %1350 = vmatprep.subr.mxu0 0.0
    %1351 = vmatpush1.xpose.msra.mxu0 0.0
    %1352 = vmatprep.subr.mxu0 0.0
    %1353 = vmatpush1.xpose.msra.mxu0 0.0
    %1354 = vmatprep.subr.mxu0 0.0
    %1355 = vmatpush1.xpose.msra.mxu0 0.0
    %1356 = vmatprep.subr.mxu0 0.0
    %1357 = vmatpush1.xpose.msra.mxu0 0.0
    %1358 = vmatprep.subr.mxu0 0.0
    %1359 = vmatpush1.xpose.msra.mxu0 0.0
    %1360 = vmatprep.subr.mxu0 0.0
    %1361 = vmatpush1.xpose.msra.mxu0 0.0
    %1362 = vmatprep.subr.mxu0 0.0
    %1363 = vmatpush1.xpose.msra.mxu0 0.0
    %1364 = vmatprep.subr.mxu0 0.0
    %1365 = vmatpush1.xpose.msra.mxu0 0.0
    %1366 = vmatprep.subr.mxu0 0.0
    %1367 = vmatpush1.xpose.msra.mxu0 0.0
    %1368 = vmatprep.subr.mxu0 0.0
    %1369 = vmatpush1.xpose.msra.mxu0 0.0
    %1370 = vmatprep.subr.mxu0 0.0
    %1371 = vmatpush1.xpose.msra.mxu0 0.0
    %1372 = vmatprep.subr.mxu0 0.0
    %1373 = vmatpush1.xpose.msra.mxu0 0.0
    %1374 = vmatprep.subr.mxu0 0.0
    %1375 = vmatpush1.xpose.msra.mxu0 0.0
    %1376 = vmatprep.subr.mxu0 0.0
    %1377 = vmatpush1.xpose.msra.mxu0 0.0
    %1378 = vmatprep.subr.mxu0 0.0
    %1379 = vmatpush1.xpose.msra.mxu0 0.0
    %1380 = vmatprep.subr.mxu0 0.0
    %1381 = vmatpush1.xpose.msra.mxu0 0.0
    %1382 = vmatprep.subr.mxu0 0.0
    %1383 = vmatpush1.xpose.msra.mxu0 0.0
    %1384 = vmatprep.subr.mxu0 0.0
    %1385 = vmatpush1.xpose.msra.mxu0 0.0
    %1386 = vmatprep.subr.mxu0 0.0
    %1387 = vmatpush1.xpose.msra.mxu0 0.0
    %1388 = vmatprep.subr.mxu0 0.0
    %1389 = vmatpush1.xpose.msra.mxu0 0.0
    %1390 = vmatprep.subr.mxu0 0.0
    %1391 = vmatpush1.xpose.msra.mxu0 0.0
    %1392 = vmatprep.subr.mxu0 0.0
    %1393 = vmatpush1.xpose.msra.mxu0 0.0
    %1394 = vmatprep.subr.mxu0 0.0
    %1395 = vmatpush1.xpose.msra.mxu0 0.0
    %1396 = vmatprep.subr.mxu0 0.0
    %1397 = vmatpush1.xpose.msra.mxu0 0.0
    %1398 = vmatprep.subr.mxu0 0.0
    %1399 = vmatpush1.xpose.msra.mxu0 0.0
    %1400 = vmatprep.mubr.f32.mxu0 0.0
    %1401 = vmatmul.mubr.f32.gmra.mrb[0].mxu0 %v1330
    %v1402 = vpop.f32.mrb[0].mxu0
    %v1403 = vadd.f32 0.0, %v1402
    %v1404 = vpop.f32.mrb[0].mxu0
    %1405 = vmatprep.mubr.f32.mxu0 0.0
    %1406 = vmatmul.mubr.f32.gmra.mrb[0].mxu0 %v1332
    %v1407 = vpop.f32.mrb[0].mxu0
    %v1408 = vadd.f32 0.0, %v1407
    %v1409 = vpop.f32.mrb[0].mxu0
    %1410 = vdwg.mxu0
    %v1411 = vmul.f32 %v1403, 0.25
    %v1412 = vmul.f32 %v1408, 0.25
    %v1413 = vsel %vm288, %v1411, -inf
    %v1414 = vsel %vm288, %v1412, -inf
    %v1415 = vsel %vm388, %v1413, -inf
    %1416 = vmax.xlane.f32.xlu0 %v1415
    %v1417 = vpop.xlane.xlu0 %1416
    %v1418 = vsel %vm388, %v1414, -inf
    %1419 = vmax.xlane.f32.xlu0 %v1418
    %v1420 = vpop.xlane.xlu0 %1419
    %v1421 = vsub.f32 %v1413, %v1417
    %v1422 = vsub.f32 %v1414, %v1420
    %v1423 = vmul.f32 %v1421, 1.442695
    %v1424 = vpow.pop %v1423
    %v1425 = vmul.f32 %v1422, 1.442695
    %v1426 = vpow.pop %v1425
    %v1427 = vsel %vm388, %v1424, 0.0
    %1428 = vadd.xlane.f32.xlu0 %v1427
    %v1429 = vpop.xlane.xlu0 %1428
    %v1430 = vsel %vm388, %v1426, 0.0
    %1431 = vadd.xlane.f32.xlu0 %v1430
    %v1432 = vpop.xlane.xlu0 %1431
    %v1433 = vrcp.pop %v1429
    %v1434 = vrcp.pop %v1432
    %v1435 = vmul.f32 %v1424, %v1433
    %v1436 = vmul.f32 %v1426, %v1434
    %1438 = vrot.lane.b32.xlu0 %v271, 112
    %v1439 = vpop.permute.xlu0 %1438
    %v1442 = vsel %vm388, %v1435, 0
    %v1445 = vsel %vm388, %v1436, 0
    %1447 = vmatprep.subr.mxu0 0.0
    %1448 = vmatpush1.msra.mxu0 %v1439
    %1449 = vmatprep.subr.mxu0 0.0
    %1450 = vmatpush1.msra.mxu0 0.0
    %1451 = vmatprep.subr.mxu0 0.0
    %1452 = vmatpush1.msra.mxu0 0.0
    %1453 = vmatprep.subr.mxu0 0.0
    %1454 = vmatpush1.msra.mxu0 0.0
    %1455 = vmatprep.subr.mxu0 0.0
    %1456 = vmatpush1.msra.mxu0 0.0
    %1457 = vmatprep.subr.mxu0 0.0
    %1458 = vmatpush1.msra.mxu0 0.0
    %1459 = vmatprep.subr.mxu0 0.0
    %1460 = vmatpush1.msra.mxu0 0.0
    %1461 = vmatprep.subr.mxu0 0.0
    %1462 = vmatpush1.msra.mxu0 0.0
    %1463 = vmatprep.subr.mxu0 0.0
    %1464 = vmatpush1.msra.mxu0 0.0
    %1465 = vmatprep.subr.mxu0 0.0
    %1466 = vmatpush1.msra.mxu0 0.0
    %1467 = vmatprep.subr.mxu0 0.0
    %1468 = vmatpush1.msra.mxu0 0.0
    %1469 = vmatprep.subr.mxu0 0.0
    %1470 = vmatpush1.msra.mxu0 0.0
    %1471 = vmatprep.subr.mxu0 0.0
    %1472 = vmatpush1.msra.mxu0 0.0
    %1473 = vmatprep.subr.mxu0 0.0
    %1474 = vmatpush1.msra.mxu0 0.0
    %1475 = vmatprep.subr.mxu0 0.0
    %1476 = vmatpush1.msra.mxu0 0.0
    %1477 = vmatprep.subr.mxu0 0.0
    %1478 = vmatpush1.msra.mxu0 0.0
    %1479 = vmatprep.subr.mxu0 0.0
    %1480 = vmatpush1.msra.mxu0 0.0
    %1481 = vmatprep.subr.mxu0 0.0
    %1482 = vmatpush1.msra.mxu0 0.0
    %1483 = vmatprep.subr.mxu0 0.0
    %1484 = vmatpush1.msra.mxu0 0.0
    %1485 = vmatprep.subr.mxu0 0.0
    %1486 = vmatpush1.msra.mxu0 0.0
    %1487 = vmatprep.subr.mxu0 0.0
    %1488 = vmatpush1.msra.mxu0 0.0
    %1489 = vmatprep.subr.mxu0 0.0
    %1490 = vmatpush1.msra.mxu0 0.0
    %1491 = vmatprep.subr.mxu0 0.0
    %1492 = vmatpush1.msra.mxu0 0.0
    %1493 = vmatprep.subr.mxu0 0.0
    %1494 = vmatpush1.msra.mxu0 0.0
    %1495 = vmatprep.subr.mxu0 0.0
    %1496 = vmatpush1.msra.mxu0 0.0
    %1497 = vmatprep.subr.mxu0 0.0
    %1498 = vmatpush1.msra.mxu0 0.0
    %1499 = vmatprep.subr.mxu0 0.0
    %1500 = vmatpush1.msra.mxu0 0.0
    %1501 = vmatprep.subr.mxu0 0.0
    %1502 = vmatpush1.msra.mxu0 0.0
    %1503 = vmatprep.subr.mxu0 0.0
    %1504 = vmatpush1.msra.mxu0 0.0
    %1505 = vmatprep.subr.mxu0 0.0
    %1506 = vmatpush1.msra.mxu0 0.0
    %1507 = vmatprep.subr.mxu0 0.0
    %1508 = vmatpush1.msra.mxu0 0.0
    %1509 = vmatprep.subr.mxu0 0.0
    %1510 = vmatpush1.msra.mxu0 0.0
    %1511 = vmatprep.mubr.f32.mxu0 0.0
    %1512 = vmatmul.mubr.f32.gmra.mrb[0].mxu0 %v1442
    %v1513 = vpop.f32.mrb[0].mxu0
    %v1514 = vadd.f32 0.0, %v1513
    %v1515 = vpop.f32.mrb[0].mxu0
    %1516 = vmatprep.mubr.f32.mxu0 0.0
    %1517 = vmatmul.mubr.f32.gmra.mrb[0].mxu0 %v1445
    %v1518 = vpop.f32.mrb[0].mxu0
    %v1519 = vadd.f32 0.0, %v1518
    %v1520 = vpop.f32.mrb[0].mxu0
    %1521 = vdwg.mxu0
    %v1523 = vsel %vm302, %v1514, 0
    %1525 = vmatprep.subr.mxu0 0.0
    %1526 = vmatpush1.msra.mxu0 %v293
    %1527 = vmatprep.subr.mxu0 0.0
    %1528 = vmatpush1.msra.mxu0 %v294
    %1529 = vmatprep.subr.mxu0 0.0
    %1530 = vmatpush1.msra.mxu0 0.0
    %1531 = vmatprep.subr.mxu0 0.0
    %1532 = vmatpush1.msra.mxu0 0.0
    %1533 = vmatprep.subr.mxu0 0.0
    %1534 = vmatpush1.msra.mxu0 0.0
    %1535 = vmatprep.subr.mxu0 0.0
    %1536 = vmatpush1.msra.mxu0 0.0
    %1537 = vmatprep.subr.mxu0 0.0
    %1538 = vmatpush1.msra.mxu0 0.0
    %1539 = vmatprep.subr.mxu0 0.0
    %1540 = vmatpush1.msra.mxu0 0.0
    %1541 = vmatprep.subr.mxu0 0.0
    %1542 = vmatpush1.msra.mxu0 0.0
    %1543 = vmatprep.subr.mxu0 0.0
    %1544 = vmatpush1.msra.mxu0 0.0
    %1545 = vmatprep.subr.mxu0 0.0
    %1546 = vmatpush1.msra.mxu0 0.0
    %1547 = vmatprep.subr.mxu0 0.0
    %1548 = vmatpush1.msra.mxu0 0.0
    %1549 = vmatprep.subr.mxu0 0.0
    %1550 = vmatpush1.msra.mxu0 0.0
    %1551 = vmatprep.subr.mxu0 0.0
    %1552 = vmatpush1.msra.mxu0 0.0
    %1553 = vmatprep.subr.mxu0 0.0
    %1554 = vmatpush1.msra.mxu0 0.0
    %1555 = vmatprep.subr.mxu0 0.0
    %1556 = vmatpush1.msra.mxu0 0.0
    %1557 = vmatprep.subr.mxu0 0.0
    %1558 = vmatpush1.msra.mxu0 0.0
    %1559 = vmatprep.subr.mxu0 0.0
    %1560 = vmatpush1.msra.mxu0 0.0
    %1561 = vmatprep.subr.mxu0 0.0
    %1562 = vmatpush1.msra.mxu0 0.0
    %1563 = vmatprep.subr.mxu0 0.0
    %1564 = vmatpush1.msra.mxu0 0.0
    %1565 = vmatprep.subr.mxu0 0.0
    %1566 = vmatpush1.msra.mxu0 0.0
    %1567 = vmatprep.subr.mxu0 0.0
    %1568 = vmatpush1.msra.mxu0 0.0
    %1569 = vmatprep.subr.mxu0 0.0
    %1570 = vmatpush1.msra.mxu0 0.0
    %1571 = vmatprep.subr.mxu0 0.0
    %1572 = vmatpush1.msra.mxu0 0.0
    %1573 = vmatprep.subr.mxu0 0.0
    %1574 = vmatpush1.msra.mxu0 0.0
    %1575 = vmatprep.subr.mxu0 0.0
    %1576 = vmatpush1.msra.mxu0 0.0
    %1577 = vmatprep.subr.mxu0 0.0
    %1578 = vmatpush1.msra.mxu0 0.0
    %1579 = vmatprep.subr.mxu0 0.0
    %1580 = vmatpush1.msra.mxu0 0.0
    %1581 = vmatprep.subr.mxu0 0.0
    %1582 = vmatpush1.msra.mxu0 0.0
    %1583 = vmatprep.subr.mxu0 0.0
    %1584 = vmatpush1.msra.mxu0 0.0
    %1585 = vmatprep.subr.mxu0 0.0
    %1586 = vmatpush1.msra.mxu0 0.0
    %1587 = vmatprep.subr.mxu0 0.0
    %1588 = vmatpush1.msra.mxu0 0.0
    %1589 = vmatprep.mubr.f32.mxu0 0.0
    %1590 = vmatmul.mubr.f32.gmra.mrb[0].mxu0 %v1523
    %v1591 = vpop.f32.mrb[0].mxu0
    %v1592 = vadd.f32 0.0, %v1591
    %v1593 = vpop.f32.mrb[0].mxu0
    %1594 = vdwg.mxu0
    %v1595 = vadd.f32 %v1321, %v1592
    %v1597 = vsel %vm302, %v1519, 0
    %1599 = vmatprep.subr.mxu0 0.0
    %1600 = vmatpush1.msra.mxu0 %v295
    %1601 = vmatprep.subr.mxu0 0.0
    %1602 = vmatpush1.msra.mxu0 %v296
    %1603 = vmatprep.subr.mxu0 0.0
    %1604 = vmatpush1.msra.mxu0 0.0
    %1605 = vmatprep.subr.mxu0 0.0
    %1606 = vmatpush1.msra.mxu0 0.0
    %1607 = vmatprep.subr.mxu0 0.0
    %1608 = vmatpush1.msra.mxu0 0.0
    %1609 = vmatprep.subr.mxu0 0.0
    %1610 = vmatpush1.msra.mxu0 0.0
    %1611 = vmatprep.subr.mxu0 0.0
    %1612 = vmatpush1.msra.mxu0 0.0
    %1613 = vmatprep.subr.mxu0 0.0
    %1614 = vmatpush1.msra.mxu0 0.0
    %1615 = vmatprep.subr.mxu0 0.0
    %1616 = vmatpush1.msra.mxu0 0.0
    %1617 = vmatprep.subr.mxu0 0.0
    %1618 = vmatpush1.msra.mxu0 0.0
    %1619 = vmatprep.subr.mxu0 0.0
    %1620 = vmatpush1.msra.mxu0 0.0
    %1621 = vmatprep.subr.mxu0 0.0
    %1622 = vmatpush1.msra.mxu0 0.0
    %1623 = vmatprep.subr.mxu0 0.0
    %1624 = vmatpush1.msra.mxu0 0.0
    %1625 = vmatprep.subr.mxu0 0.0
    %1626 = vmatpush1.msra.mxu0 0.0
    %1627 = vmatprep.subr.mxu0 0.0
    %1628 = vmatpush1.msra.mxu0 0.0
    %1629 = vmatprep.subr.mxu0 0.0
    %1630 = vmatpush1.msra.mxu0 0.0
    %1631 = vmatprep.subr.mxu0 0.0
    %1632 = vmatpush1.msra.mxu0 0.0
    %1633 = vmatprep.subr.mxu0 0.0
    %1634 = vmatpush1.msra.mxu0 0.0
    %1635 = vmatprep.subr.mxu0 0.0
    %1636 = vmatpush1.msra.mxu0 0.0
    %1637 = vmatprep.subr.mxu0 0.0
    %1638 = vmatpush1.msra.mxu0 0.0
    %1639 = vmatprep.subr.mxu0 0.0
    %1640 = vmatpush1.msra.mxu0 0.0
    %1641 = vmatprep.subr.mxu0 0.0
    %1642 = vmatpush1.msra.mxu0 0.0
    %1643 = vmatprep.subr.mxu0 0.0
    %1644 = vmatpush1.msra.mxu0 0.0
    %1645 = vmatprep.subr.mxu0 0.0
    %1646 = vmatpush1.msra.mxu0 0.0
    %1647 = vmatprep.subr.mxu0 0.0
    %1648 = vmatpush1.msra.mxu0 0.0
    %1649 = vmatprep.subr.mxu0 0.0
    %1650 = vmatpush1.msra.mxu0 0.0
    %1651 = vmatprep.subr.mxu0 0.0
    %1652 = vmatpush1.msra.mxu0 0.0
    %1653 = vmatprep.subr.mxu0 0.0
    %1654 = vmatpush1.msra.mxu0 0.0
    %1655 = vmatprep.subr.mxu0 0.0
    %1656 = vmatpush1.msra.mxu0 0.0
    %1657 = vmatprep.subr.mxu0 0.0
    %1658 = vmatpush1.msra.mxu0 0.0
    %1659 = vmatprep.subr.mxu0 0.0
    %1660 = vmatpush1.msra.mxu0 0.0
    %1661 = vmatprep.subr.mxu0 0.0
    %1662 = vmatpush1.msra.mxu0 0.0
    %1663 = vmatprep.mubr.f32.mxu0 0.0
    %1664 = vmatmul.mubr.f32.gmra.mrb[0].mxu0 %v1597
    %v1665 = vpop.f32.mrb[0].mxu0
    %v1666 = vadd.f32 0.0, %v1665
    %v1667 = vpop.f32.mrb[0].mxu0
    %1668 = vdwg.mxu0
    %v1669 = vadd.f32 %v1595, %v1666
    %1670 = vst.msk [vmem:[#allocation11 + $0x8] sm:$0xff] %vm115, %v1669
    // Predicated region
    $region42: #{tpu_custom_call.1} parent=1 // pred_check
      _
    $region43: #{tpu_custom_call.1} parent=1 // pred_check_branch
      %1672 = sbr.rel (0) target = $region45
    $region44: #{tpu_custom_call.1} parent=1 // pred_region
      %s1674 = ssub.s32 256, 256
      %1675 = vsyncadd [#allocation4], %s1674
      %s1676 = sshll.u32 [#allocation11], 4
      %s1677 = int_to_ptr.vmem [resolvable:$true] %s1676
      %1682 = dma.vmem_to_hbm [thread:$0]  %s1677, 256, %s5, [#allocation4], 128, 128, 8
    $region45: #{tpu_custom_call.1} parent=1 // pred_fallthru
      _
    // Predicated region
    $region46: #{tpu_custom_call.1} parent=1 // pred_check
      _
    $region47: #{tpu_custom_call.1} parent=1 // pred_check_branch
      %1684 = sbr.rel (0) target = $region49
    $region48: #{tpu_custom_call.1} parent=1 // pred_region
      %1685 = dma.done [#allocation4], 256
    $region49: #{tpu_custom_call.1} parent=1 // pred_fallthru
      _
    %1686 = vsyncpa [#allocation3], 1
    %1687 = vsyncpa [#allocation6], 1
    %1688 = vsyncpa [#allocation9], 1
    %1689 = vsyncpa [#allocation4], 1

</llo_original>
